<compile_context>
chip_gen: v7x
topology: tpu7x:2x2x1
jax: 0.10.0
libtpu: 0.0.40
codegen_flags: <defaults>
</compile_context>

<pallas_src>
import functools
import math

import jax
import jax.numpy as jnp
from jax.experimental import pallas as pl
from jax.experimental.pallas import tpu as pltpu


def kan_linear_kernel(x_ref, tab_ref, w_ref, o_ref, *,
                      in_features, spline_order, ncols):
    IN = in_features
    K = spline_order
    NT0 = ncols - 1                   # number of degree-0 bases
    NB = NT0 - K                      # = grid_size + spline_order
    W_pad = tab_ref.shape[1]          # lane-dense width (multiple of 128)

    x = x_ref[...]                    # (TB, IN) f32

    # x replicated across the knot-interval axis (t-major lane layout:
    # x_wide[:, t*IN + i] == x[:, i]); built once per tile.
    n_rep = -(-W_pad // IN)
    x_wide = jnp.concatenate([x] * n_rep, axis=-1)[:, :W_pad]   # (TB, W_pad)

    def trow(r):
        # One precomputed table row as a (1, W_pad) sublane-broadcastable operand.
        return tab_ref[pl.ds(r, 1), :]

    # Degree-0 bases: indicator of x in [grid[i, t], grid[i, t+1)).
    bases = ((x_wide >= trow(0)) & (x_wide < trow(1))).astype(jnp.float32)

    # Cox–de Boor recursion, fully vectorized over (t, i) along lanes.
    # Padded lanes (t beyond the valid terms of this degree) have zero table
    # entries, so they are forced to zero every step and never pollute valid
    # lanes (including the lanes the roll wraps around).
    for k in range(1, K + 1):
        r = 2 + 4 * (k - 1)
        glo, inv_lo = trow(r), trow(r + 1)        # grid[i,t],     1/(g[t+k]-g[t])
        ghi, inv_hi = trow(r + 2), trow(r + 3)    # grid[i,t+k+1], 1/(g[t+k+1]-g[t+1])
        # bases[t+1] aligned to position t: rotate left by IN lanes (XLU).
        b_next = pltpu.roll(bases, shift=W_pad - IN, axis=1)
        bases = ((x_wide - glo) * inv_lo * bases
                 + (ghi - x_wide) * inv_hi * b_next)

    # Final bases: first NB*IN lanes, already in the t*IN+i order the combined
    # weight was permuted to in the wrapper (no concat / repack needed).
    bases_nb = bases[:, : NB * IN]                # (TB, NB*IN)

    # SiLU on the VPU/EUP (exact sigmoid; approx reciprocal would eat the 1e-4 budget).
    silu_x = x * (1.0 / (1.0 + jnp.exp(-x)))      # (TB, IN)

    # Fused spline + base matmul: single MXU op per tile.
    lhs = jnp.concatenate([bases_nb, silu_x], axis=-1)     # (TB, NB*IN + IN)
    o_ref[...] = jnp.dot(lhs, w_ref[...],
                         preferred_element_type=jnp.float32).astype(o_ref.dtype)


def _round_up(n, m):
    return ((n + m - 1) // m) * m


def _build_spline_tables(grid_buf, spline_order):
    """Lane-dense knot / reciprocal-span tables, shape (2 + 4*K, W_pad).

    Row layout (all flattened t-major, index t*IN + i, zero-padded to W_pad):
      0: grid[i, t]           1: grid[i, t+1]                      (degree-0 bounds)
      2+4(k-1)+0: grid[i, t]              2+4(k-1)+1: 1/(grid[i,t+k]   - grid[i,t])
      2+4(k-1)+2: grid[i, t+k+1]          2+4(k-1)+3: 1/(grid[i,t+k+1] - grid[i,t+1])
    Denominators are nonzero for the module's uniform knot grid; repeated knots
    (possible only after update_grid with degenerate data) would need a guard,
    matching the divide-by-zero the original PyTorch code would also hit.
    """
    in_features, ncols = grid_buf.shape
    nt0 = ncols - 1
    w = nt0 * in_features
    w_pad = _round_up(w, 128)
    g_t_major = grid_buf.T.astype(jnp.float32)       # (NCOLS, IN): row t = knot t

    def row(vals):                                   # vals: (T, IN) -> (W_pad,)
        flat = vals.reshape(-1)
        return jnp.pad(flat, (0, w_pad - flat.shape[0]))

    rows = [row(g_t_major[:nt0]), row(g_t_major[1:nt0 + 1])]
    for k in range(1, spline_order + 1):
        tk = nt0 - k
        g_t = g_t_major[:tk]
        g_tk = g_t_major[k:k + tk]
        g_t1 = g_t_major[1:1 + tk]
        g_tk1 = g_t_major[k + 1:k + 1 + tk]
        rows += [row(g_t), row(1.0 / (g_tk - g_t)),
                 row(g_tk1), row(1.0 / (g_tk1 - g_t1))]
    return jnp.stack(rows, axis=0)


def kan_linear_forward(x, grid_buf, base_weight, spline_weight, spline_scaler,
                       *, grid_size=5, spline_order=3, block_b=128):
    B, IN = x.shape
    OUT = base_weight.shape[0]
    NB = grid_size + spline_order
    NCOLS = grid_buf.shape[1]
    assert NCOLS == grid_size + 2 * spline_order + 1

    block_b = min(block_b, _round_up(B, 8))
    B_pad = _round_up(B, block_b)
    OUT_pad = _round_up(OUT, 128)

    # Zero-pad the batch so the grid tiles it exactly (rows are independent).
    x_p = x if B_pad == B else jnp.pad(x, ((0, B_pad - B), (0, 0)))

    # Precomputed lane-dense knot / reciprocal-span tables (resident in VMEM).
    tab = _build_spline_tables(grid_buf, spline_order)
    NTAB, W_pad = tab.shape

    # Combined weight for the fused matmul, lane-dense in OUT:
    #   rows [0, NB*IN)      : scaled_spline_weight permuted so row t*IN + i
    #                          equals scaled_spline_weight[o, i, t]
    #   rows [NB*IN, +IN)    : base_weight.T
    w_sc = spline_weight * spline_scaler[:, :, None]            # (OUT, IN, NB)
    ws_core = jnp.transpose(w_sc, (2, 1, 0)).reshape(NB * IN, OUT)
    w_all = jnp.zeros((NB * IN + IN, OUT_pad), jnp.float32)
    w_all = w_all.at[:NB * IN, :OUT].set(ws_core)
    w_all = w_all.at[NB * IN:, :OUT].set(base_weight.T)

    kernel = functools.partial(kan_linear_kernel, in_features=IN,
                               spline_order=spline_order, ncols=NCOLS)

    out_padded = pl.pallas_call(
        kernel,
        out_shape=jax.ShapeDtypeStruct((B_pad, OUT_pad), jnp.float32),
        grid_spec=pltpu.PrefetchScalarGridSpec(
            num_scalar_prefetch=0,
            grid=(B_pad // block_b,),
            in_specs=[
                pl.BlockSpec((block_b, IN), lambda i: (i, 0)),          # x (batch tile)
                pl.BlockSpec((NTAB, W_pad), lambda i: (0, 0)),          # knot/span tables
                pl.BlockSpec((NB * IN + IN, OUT_pad), lambda i: (0, 0)),# fused weight
            ],
            out_specs=pl.BlockSpec((block_b, OUT_pad), lambda i: (i, 0)),
        ),
        compiler_params=pltpu.CompilerParams(
            dimension_semantics=("parallel",)),
    )(x_p, tab, w_all)

    return out_padded[:B, :OUT]


def kan_linear_ref(x, grid_buf, base_weight, spline_weight, spline_scaler,
                   *, spline_order=3):
    """Pure-JAX reference mirroring the PyTorch module's forward."""
    xg = x[:, :, None]                                  # (B, IN, 1)
    g = grid_buf[None, :, :]                            # (1, IN, NCOLS)
    bases = ((xg >= g[:, :, :-1]) & (xg < g[:, :, 1:])).astype(x.dtype)
    for k in range(1, spline_order + 1):
        bases = ((xg - g[:, :, :-(k + 1)]) / (g[:, :, k:-1] - g[:, :, :-(k + 1)])
                 * bases[:, :, :-1]
                 + (g[:, :, k + 1:] - xg) / (g[:, :, k + 1:] - g[:, :, 1:-k])
                 * bases[:, :, 1:])
    base_out = (x * jax.nn.sigmoid(x)) @ base_weight.T
    w_sc = spline_weight * spline_scaler[:, :, None]
    spline_out = bases.reshape(x.shape[0], -1) @ w_sc.reshape(w_sc.shape[0], -1).T
    return base_out + spline_out


if __name__ == "__main__":
    # Small, KANLinear-consistent shapes.
    batch, in_features, out_features = 256, 32, 64
    grid_size, spline_order = 5, 3
    grid_range = (-1.0, 1.0)
    scale_base, scale_spline = 1.0, 1.0

    key = jax.random.PRNGKey(0)
    k_x, k_bw, k_sw, k_ss = jax.random.split(key, 4)

    # Knot grid buffer: (in_features, grid_size + 2*spline_order + 1)
    h = (grid_range[1] - grid_range[0]) / grid_size
    knots = (jnp.arange(-spline_order, grid_size + spline_order + 1, dtype=jnp.float32)
             * h + grid_range[0])
    grid_buf = jnp.tile(knots[None, :], (in_features, 1))

    # Deterministic synthetic parameter init (kaiming-uniform-style bounds).
    # TODO(synk): curve2coeff (lstsq-based) init from the PyTorch reset_parameters is
    # replaced by a plain uniform init; forward-pass semantics are unaffected.
    a_base = math.sqrt(5.0) * scale_base
    bound_base = math.sqrt(2.0 / (1.0 + a_base ** 2)) * math.sqrt(3.0 / in_features)
    base_weight = jax.random.uniform(
        k_bw, (out_features, in_features), jnp.float32, -bound_base, bound_base)

    spline_weight = jax.random.uniform(
        k_sw, (out_features, in_features, grid_size + spline_order),
        jnp.float32, -0.05, 0.05)

    a_sp = math.sqrt(5.0) * scale_spline
    bound_sp = math.sqrt(2.0 / (1.0 + a_sp ** 2)) * math.sqrt(3.0 / in_features)
    spline_scaler = jax.random.uniform(
        k_ss, (out_features, in_features), jnp.float32, -bound_sp, bound_sp)

    # Input in the grid range so the splines are active.
    x = jax.random.uniform(k_x, (batch, in_features), jnp.float32, -1.0, 1.0)

    out = kan_linear_forward(x, grid_buf, base_weight, spline_weight, spline_scaler,
                             grid_size=grid_size, spline_order=spline_order,
                             block_b=128)
    out = jax.block_until_ready(out)

    ref = kan_linear_ref(x, grid_buf, base_weight, spline_weight, spline_scaler,
                         spline_order=spline_order)

    assert out.shape == (batch, out_features)
    assert jnp.allclose(out, ref, atol=1e-4, rtol=1e-4), \
        f"max abs err {jnp.max(jnp.abs(out - ref))}"

    print("KERNEL_OK")
</pallas_src>

<mosaic_0001>
module attributes {stable_mosaic.version = 11 : i64} {
  func.func @kan_linear_kernel(%arg0: i32, %arg1: memref<128x32xf32, #tpu.memory_space<vmem>>, %arg2: memref<14x384xf32, #tpu.memory_space<vmem>>, %arg3: memref<288x128xf32, #tpu.memory_space<vmem>>, %arg4: memref<128x128xf32, #tpu.memory_space<vmem>>) attributes {dimension_semantics = [#tpu.dimension_semantics<parallel>], iteration_bounds = array<i64: 2>, scalar_prefetch = 0 : i64, scratch_operands = 0 : i64, tpu.core_type = #tpu.core_type<tc>, window_params = [{transform_indices = @transform_0, window_bounds = array<i64: 128, 32>}, {pipeline_mode = #tpu.pipeline_mode<synchronous>, transform_indices = @transform_1, window_bounds = array<i64: 14, 384>}, {pipeline_mode = #tpu.pipeline_mode<synchronous>, transform_indices = @transform_2, window_bounds = array<i64: 288, 128>}, {transform_indices = @transform_3, window_bounds = array<i64: 128, 128>}]} {
    %c0 = arith.constant 0 : index
    %c0_0 = arith.constant 0 : index
    %0 = vector.load %arg1[%c0, %c0_0] : memref<128x32xf32, #tpu.memory_space<vmem>>, vector<128x32xf32>
    %1 = tpu.concatenate %0, %0, %0, %0, %0, %0, %0, %0, %0, %0, %0, %0 in 1 : vector<128x32xf32>, vector<128x32xf32>, vector<128x32xf32>, vector<128x32xf32>, vector<128x32xf32>, vector<128x32xf32>, vector<128x32xf32>, vector<128x32xf32>, vector<128x32xf32>, vector<128x32xf32>, vector<128x32xf32>, vector<128x32xf32> -> vector<128x384xf32>
    %c0_1 = arith.constant 0 : index
    %c0_2 = arith.constant 0 : index
    %2 = vector.load %arg2[%c0_1, %c0_2] : memref<14x384xf32, #tpu.memory_space<vmem>>, vector<1x384xf32>
    %3 = vector.broadcast %2 : vector<1x384xf32> to vector<128x384xf32>
    %4 = arith.cmpf oge, %1, %3 : vector<128x384xf32>
    %c1 = arith.constant 1 : index
    %c0_3 = arith.constant 0 : index
    %5 = vector.load %arg2[%c1, %c0_3] : memref<14x384xf32, #tpu.memory_space<vmem>>, vector<1x384xf32>
    %6 = vector.broadcast %5 : vector<1x384xf32> to vector<128x384xf32>
    %7 = arith.cmpf olt, %1, %6 : vector<128x384xf32>
    %8 = arith.andi %4, %7 : vector<128x384xi1>
    %9 = arith.extui %8 : vector<128x384xi1> to vector<128x384xi32>
    %10 = arith.sitofp %9 : vector<128x384xi32> to vector<128x384xf32>
    %c2 = arith.constant 2 : index
    %c0_4 = arith.constant 0 : index
    %11 = vector.load %arg2[%c2, %c0_4] : memref<14x384xf32, #tpu.memory_space<vmem>>, vector<1x384xf32>
    %c3 = arith.constant 3 : index
    %c0_5 = arith.constant 0 : index
    %12 = vector.load %arg2[%c3, %c0_5] : memref<14x384xf32, #tpu.memory_space<vmem>>, vector<1x384xf32>
    %c4 = arith.constant 4 : index
    %c0_6 = arith.constant 0 : index
    %13 = vector.load %arg2[%c4, %c0_6] : memref<14x384xf32, #tpu.memory_space<vmem>>, vector<1x384xf32>
    %c5 = arith.constant 5 : index
    %c0_7 = arith.constant 0 : index
    %14 = vector.load %arg2[%c5, %c0_7] : memref<14x384xf32, #tpu.memory_space<vmem>>, vector<1x384xf32>
    %c352_i32 = arith.constant 352 : i32
    %15 = tpu.dynamic_rotate %10 by %c352_i32 dim 1 : vector<128x384xf32>, i32 -> vector<128x384xf32>
    %16 = vector.broadcast %11 : vector<1x384xf32> to vector<128x384xf32>
    %17 = arith.subf %1, %16 : vector<128x384xf32>
    %18 = vector.broadcast %12 : vector<1x384xf32> to vector<128x384xf32>
    %19 = arith.mulf %17, %18 : vector<128x384xf32>
    %20 = arith.mulf %19, %10 : vector<128x384xf32>
    %21 = vector.broadcast %13 : vector<1x384xf32> to vector<128x384xf32>
    %22 = arith.subf %21, %1 : vector<128x384xf32>
    %23 = vector.broadcast %14 : vector<1x384xf32> to vector<128x384xf32>
    %24 = arith.mulf %22, %23 : vector<128x384xf32>
    %25 = arith.mulf %24, %15 : vector<128x384xf32>
    %26 = arith.addf %20, %25 : vector<128x384xf32>
    %c6 = arith.constant 6 : index
    %c0_8 = arith.constant 0 : index
    %27 = vector.load %arg2[%c6, %c0_8] : memref<14x384xf32, #tpu.memory_space<vmem>>, vector<1x384xf32>
    %c7 = arith.constant 7 : index
    %c0_9 = arith.constant 0 : index
    %28 = vector.load %arg2[%c7, %c0_9] : memref<14x384xf32, #tpu.memory_space<vmem>>, vector<1x384xf32>
    %c8 = arith.constant 8 : index
    %c0_10 = arith.constant 0 : index
    %29 = vector.load %arg2[%c8, %c0_10] : memref<14x384xf32, #tpu.memory_space<vmem>>, vector<1x384xf32>
    %c9 = arith.constant 9 : index
    %c0_11 = arith.constant 0 : index
    %30 = vector.load %arg2[%c9, %c0_11] : memref<14x384xf32, #tpu.memory_space<vmem>>, vector<1x384xf32>
    %c352_i32_12 = arith.constant 352 : i32
    %31 = tpu.dynamic_rotate %26 by %c352_i32_12 dim 1 : vector<128x384xf32>, i32 -> vector<128x384xf32>
    %32 = vector.broadcast %27 : vector<1x384xf32> to vector<128x384xf32>
    %33 = arith.subf %1, %32 : vector<128x384xf32>
    %34 = vector.broadcast %28 : vector<1x384xf32> to vector<128x384xf32>
    %35 = arith.mulf %33, %34 : vector<128x384xf32>
    %36 = arith.mulf %35, %26 : vector<128x384xf32>
    %37 = vector.broadcast %29 : vector<1x384xf32> to vector<128x384xf32>
    %38 = arith.subf %37, %1 : vector<128x384xf32>
    %39 = vector.broadcast %30 : vector<1x384xf32> to vector<128x384xf32>
    %40 = arith.mulf %38, %39 : vector<128x384xf32>
    %41 = arith.mulf %40, %31 : vector<128x384xf32>
    %42 = arith.addf %36, %41 : vector<128x384xf32>
    %c10 = arith.constant 10 : index
    %c0_13 = arith.constant 0 : index
    %43 = vector.load %arg2[%c10, %c0_13] : memref<14x384xf32, #tpu.memory_space<vmem>>, vector<1x384xf32>
    %c11 = arith.constant 11 : index
    %c0_14 = arith.constant 0 : index
    %44 = vector.load %arg2[%c11, %c0_14] : memref<14x384xf32, #tpu.memory_space<vmem>>, vector<1x384xf32>
    %c12 = arith.constant 12 : index
    %c0_15 = arith.constant 0 : index
    %45 = vector.load %arg2[%c12, %c0_15] : memref<14x384xf32, #tpu.memory_space<vmem>>, vector<1x384xf32>
    %c13 = arith.constant 13 : index
    %c0_16 = arith.constant 0 : index
    %46 = vector.load %arg2[%c13, %c0_16] : memref<14x384xf32, #tpu.memory_space<vmem>>, vector<1x384xf32>
    %c352_i32_17 = arith.constant 352 : i32
    %47 = tpu.dynamic_rotate %42 by %c352_i32_17 dim 1 : vector<128x384xf32>, i32 -> vector<128x384xf32>
    %48 = vector.broadcast %43 : vector<1x384xf32> to vector<128x384xf32>
    %49 = arith.subf %1, %48 : vector<128x384xf32>
    %50 = vector.broadcast %44 : vector<1x384xf32> to vector<128x384xf32>
    %51 = arith.mulf %49, %50 : vector<128x384xf32>
    %52 = arith.mulf %51, %42 : vector<128x384xf32>
    %53 = vector.broadcast %45 : vector<1x384xf32> to vector<128x384xf32>
    %54 = arith.subf %53, %1 : vector<128x384xf32>
    %55 = vector.broadcast %46 : vector<1x384xf32> to vector<128x384xf32>
    %56 = arith.mulf %54, %55 : vector<128x384xf32>
    %57 = arith.mulf %56, %47 : vector<128x384xf32>
    %58 = arith.addf %52, %57 : vector<128x384xf32>
    %59 = vector.extract_strided_slice %58 {offsets = [0, 0], sizes = [128, 256], strides = [1, 1]} : vector<128x384xf32> to vector<128x256xf32>
    %cst = arith.constant 0.000000e+00 : f32
    %60 = vector.broadcast %cst : f32 to vector<128x32xf32>
    %61 = arith.subf %60, %0 : vector<128x32xf32>
    %62 = math.exp %61 : vector<128x32xf32>
    %cst_18 = arith.constant 1.000000e+00 : f32
    %63 = vector.broadcast %cst_18 : f32 to vector<128x32xf32>
    %64 = arith.addf %63, %62 : vector<128x32xf32>
    %cst_19 = arith.constant 1.000000e+00 : f32
    %65 = vector.broadcast %cst_19 : f32 to vector<128x32xf32>
    %66 = arith.divf %65, %64 : vector<128x32xf32>
    %67 = arith.mulf %0, %66 : vector<128x32xf32>
    %68 = tpu.concatenate %59, %67 in 1 : vector<128x256xf32>, vector<128x32xf32> -> vector<128x288xf32>
    %c0_20 = arith.constant 0 : index
    %c0_21 = arith.constant 0 : index
    %69 = vector.load %arg3[%c0_20, %c0_21] : memref<288x128xf32, #tpu.memory_space<vmem>>, vector<288x128xf32>
    %cst_22 = arith.constant dense<0.000000e+00> : vector<128x128xf32>
    %70 = tpu.matmul %68, %69, %cst_22 {dimension_numbers = #tpu.dot_dimension_numbers<[1], [0], [0], [1], [0, 0, 1, 1], [], []>} : vector<128x288xf32>, vector<288x128xf32>, vector<128x128xf32> -> vector<128x128xf32>
    %c0_23 = arith.constant 0 : index
    %c0_24 = arith.constant 0 : index
    %71 = vector.load %arg4[%c0_23, %c0_24] : memref<128x128xf32, #tpu.memory_space<vmem>>, vector<128x128xf32>
    tpu.vector_store %arg4[%c0_23, %c0_24], %70 {strides = array<i32>} : memref<128x128xf32, #tpu.memory_space<vmem>>, vector<128x128xf32>,
    return
  }
  func.func @transform_0(%arg0: i32) -> (i32, i32) {
    %c0_i32 = arith.constant 0 : i32
    %c0_i32_0 = arith.constant 0 : i32
    return %arg0, %c0_i32 : i32, i32
  }
  func.func @transform_1(%arg0: i32) -> (i32, i32) {
    %c0_i32 = arith.constant 0 : i32
    %c0_i32_0 = arith.constant 0 : i32
    %c0_i32_1 = arith.constant 0 : i32
    return %c0_i32, %c0_i32_0 : i32, i32
  }
  func.func @transform_2(%arg0: i32) -> (i32, i32) {
    %c0_i32 = arith.constant 0 : i32
    %c0_i32_0 = arith.constant 0 : i32
    %c0_i32_1 = arith.constant 0 : i32
    return %c0_i32, %c0_i32_0 : i32, i32
  }
  func.func @transform_3(%arg0: i32) -> (i32, i32) {
    %c0_i32 = arith.constant 0 : i32
    %c0_i32_0 = arith.constant 0 : i32
    return %arg0, %c0_i32 : i32, i32
  }
}

</mosaic_0001>

<llo_original>
// kernel: tpu_custom_call.1
$region0: #{tpu_custom_call.1}
  #allocation0 [shape = 'u32[]', space=smem, size = 0x4, offset = 0x4, fixed_abs, tag = 'smem constant byte address 0x4 - core index']
  #allocation1 [shape = 'u32[144,128]{1,0:T(1,128)}', space=vmem, size = 0x12000, scoped, tag = 'internal scratch']
  %s0 = inlined_call_operand.vmem [shape: f32[256,32], index: 0, kind: input, shape index: {}]
  %s1 = inlined_call_operand.hbm [shape: f32[14,384], index: 1, kind: input, shape index: {}]
  %s2 = inlined_call_operand.vmem [shape: f32[288,128], index: 2, kind: input, shape index: {}]
  %s3 = inlined_call_operand.hbm [shape: f32[256,128], index: 3, kind: output, shape index: {}]
  %s4 = sld [smem:[#allocation0]]
  $region49: #{tpu_custom_call.1} parent=0
    _
  %s6 = ssub.s32 1, %s4
  %s7 = scalar_select 0, %s6, %s4
  $region1: #{tpu_custom_call.1} parent=0
    #allocation2 [shape = 'u8[24576]{0}', space=vmem, size = 0x6000, scoped, tag = 'input window, operand 1, single buffered']
    #allocation3 [shape = 's32[2]{0}', space=sflag, size = 0x8, scoped, tag = 'scoped memory for tpu_custom_call.1']
    #allocation4 [shape = 's32[2]{0}', space=sflag, size = 0x8, scoped, tag = 'scoped memory for tpu_custom_call.1']
    #allocation5 [shape = 'u8[131072]{0}', space=vmem, size = 0x20000, scoped, tag = 'output window, operand 0']
    %8 = vsyncpa [#allocation3], 0
    %9 = vsyncpa [#allocation4], 0
    %s10 = scalar_lea.sflag [#allocation4], 1
    %11 = vsyncpa %s10, 0
    loop: start=0, step=1, limit=4
    $region2: #{tpu_custom_call.1} parent=1 // loop_pre_header
      _
    $region3: #{tpu_custom_call.1} parent=1 // loop_header
      %s13 = sphi 0, %s17
      %p14 = scmp.ge.s32.totalorder %s13, 4
      %s23 = sphi 0, %s25
      %s26 = sphi 0, %s23
      %s27 = sphi 0, %s26
      %s43 = sphi 0, %s27
      %s47 = sphi 0, %s47
      %s49 = sphi 0, %s47
      %s50 = sphi 0, %s49
      %s64 = sphi 0, %s50
      %s68 = sphi 0, %s68
      %s70 = sphi 0, %s68
      %s71 = sphi 0, %s70
      %s85 = sphi 0, %s71
      %s91 = sphi 0, %s93
      %s94 = sphi 0, %s91
      %s95 = sphi 0, %s94
      %s111 = sphi 0, %s95
    $region4: #{tpu_custom_call.1} parent=1 // loop_header_branch
      %16 = sbr.rel (%p14) target = $region8
    $region5: #{tpu_custom_call.1} parent=1 // loop_body
      %s18 = ssub.s32 %s13, 1
      %s19 = ssub.s32 %s13, 2
      %s20 = sadd.s32 %s13, 1
      %s21 = ssub.s32 %s13, %s20
      %p22 = scmp.eq.s32.totalorder %s21, 0
      %s24 = sadd.s32 %s23, 1
      %s25 = scalar_select %p22, %s23, %s24
      %p28 = pneg %p22
      %p29 = scmp.eq.s32.totalorder %s13, 1
      %p30 = por %p28, %p29
      %p31 = scmp.ne.s32.totalorder %s23, %s26
      %p32 = scmp.eq.s32.totalorder %s13, 0
      %p33 = por %p31, %p32
      %p34 = scmp.ne.s32.totalorder %s23, %s26
      %p35 = scmp.eq.s32.totalorder %s18, 1
      %p36 = por %p34, %p35
      %p37 = scmp.ne.s32.totalorder %s26, %s27
      %p38 = scmp.eq.s32.totalorder %s18, 0
      %p39 = por %p37, %p38
      %p40 = scmp.ne.s32.totalorder %s26, %s27
      %p41 = scmp.eq.s32.totalorder %s19, 1
      %p42 = por %p40, %p41
      %p44 = scmp.ne.s32.totalorder %s27, %s43
      %p45 = scmp.eq.s32.totalorder %s19, 0
      %p46 = por %p44, %p45
      %s48 = sadd.s32 %s47, 1
      %p51 = scmp.eq.s32.totalorder %s13, 1
      %p52 = scmp.ne.s32.totalorder %s47, %s49
      %p53 = scmp.eq.s32.totalorder %s13, 0
      %p54 = por %p52, %p53
      %p55 = scmp.ne.s32.totalorder %s47, %s49
      %p56 = scmp.eq.s32.totalorder %s18, 1
      %p57 = por %p55, %p56
      %p58 = scmp.ne.s32.totalorder %s49, %s50
      %p59 = scmp.eq.s32.totalorder %s18, 0
      %p60 = por %p58, %p59
      %p61 = scmp.ne.s32.totalorder %s49, %s50
      %p62 = scmp.eq.s32.totalorder %s19, 1
      %p63 = por %p61, %p62
      %p65 = scmp.ne.s32.totalorder %s50, %s64
      %p66 = scmp.eq.s32.totalorder %s19, 0
      %p67 = por %p65, %p66
      %s69 = sadd.s32 %s68, 1
      %p72 = scmp.eq.s32.totalorder %s13, 1
      %p73 = scmp.ne.s32.totalorder %s68, %s70
      %p74 = scmp.eq.s32.totalorder %s13, 0
      %p75 = por %p73, %p74
      %p76 = scmp.ne.s32.totalorder %s68, %s70
      %p77 = scmp.eq.s32.totalorder %s18, 1
      %p78 = por %p76, %p77
      %p79 = scmp.ne.s32.totalorder %s70, %s71
      %p80 = scmp.eq.s32.totalorder %s18, 0
      %p81 = por %p79, %p80
      %p82 = scmp.ne.s32.totalorder %s70, %s71
      %p83 = scmp.eq.s32.totalorder %s19, 1
      %p84 = por %p82, %p83
      %p86 = scmp.ne.s32.totalorder %s71, %s85
      %p87 = scmp.eq.s32.totalorder %s19, 0
      %p88 = por %p86, %p87
      %s89 = ssub.s32 %s13, %s20
      %p90 = scmp.eq.s32.totalorder %s89, 0
      %s92 = sadd.s32 %s91, 1
      %s93 = scalar_select %p90, %s91, %s92
      %p96 = pneg %p90
      %p97 = scmp.eq.s32.totalorder %s13, 1
      %p98 = por %p96, %p97
      %p99 = scmp.ne.s32.totalorder %s91, %s94
      %p100 = scmp.eq.s32.totalorder %s13, 0
      %p101 = por %p99, %p100
      %p102 = scmp.ne.s32.totalorder %s91, %s94
      %p103 = scmp.eq.s32.totalorder %s18, 1
      %p104 = por %p102, %p103
      %p105 = scmp.ne.s32.totalorder %s94, %s95
      %p106 = scmp.eq.s32.totalorder %s18, 0
      %p107 = por %p105, %p106
      %p108 = scmp.ne.s32.totalorder %s94, %s95
      %p109 = scmp.eq.s32.totalorder %s19, 1
      %p110 = por %p108, %p109
      %p112 = scmp.ne.s32.totalorder %s95, %s111
      %p113 = scmp.eq.s32.totalorder %s19, 0
      %p114 = por %p112, %p113
      %p115 = scmp.le.s32.totalorder 1, %s13
      %p116 = scmp.lt.s32.totalorder %s13, 3
      %p117 = pnand %p115, %p116
      %p118 = pneg %p117
      // Predicated region
      $region9: #{tpu_custom_call.1} parent=5 // pred_check
        _
      $region10: #{tpu_custom_call.1} parent=5 // pred_check_branch
        %120 = sbr.rel (%p117) target = $region12
      $region11: #{tpu_custom_call.1} parent=5 // pred_region
        %s121 = ssub.s32 %s13, 1
        // Predicated region
        $region13: #{tpu_custom_call.1} parent=11 // pred_check
          %p122 = pneg %p60
        $region14: #{tpu_custom_call.1} parent=11 // pred_check_branch
          %124 = sbr.rel (%p122) target = $region16
        $region15: #{tpu_custom_call.1} parent=11 // pred_region
          %s126 = ssub.s32 768, 768
          %127 = vsyncadd [#allocation3], %s126
          %s128 = sshll.u32 [#allocation2], 4
          %s129 = int_to_ptr.vmem [resolvable:$true] %s128
          %134 = dma.hbm_to_vmem [thread:$0]  %s1, 768, %s129, [#allocation3], 384, 384, 24
        $region16: #{tpu_custom_call.1} parent=11 // pred_fallthru
          _
        // Predicated region
        $region17: #{tpu_custom_call.1} parent=11 // pred_check
          %p135 = pneg %p81
        $region18: #{tpu_custom_call.1} parent=11 // pred_check_branch
          %137 = sbr.rel (%p135) target = $region20
        $region19: #{tpu_custom_call.1} parent=11 // pred_region
          _
        $region20: #{tpu_custom_call.1} parent=11 // pred_fallthru
          _
      $region12: #{tpu_custom_call.1} parent=5 // pred_fallthru
        _
      %p138 = scmp.lt.s32.totalorder %s13, 2
      // Predicated region
      $region21: #{tpu_custom_call.1} parent=5 // pred_check
        %p139 = pneg %p138
      $region22: #{tpu_custom_call.1} parent=5 // pred_check_branch
        %141 = sbr.rel (%p139) target = $region24
      $region23: #{tpu_custom_call.1} parent=5 // pred_region
        // Predicated region
        $region25: #{tpu_custom_call.1} parent=23 // pred_check
          %p142 = pneg %p33
        $region26: #{tpu_custom_call.1} parent=23 // pred_check_branch
          %144 = sbr.rel (%p142) target = $region28
        $region27: #{tpu_custom_call.1} parent=23 // pred_region
          %s145 = smul.u32 16, %s13
          %p146 = scmp.lt.s32.totalorder %s145, 31
          %s147 = scalar_select %p146, %s145, 31
          %s148 = smul.addr %s147, 8
          %s149 = scalar_lea.vmem %s0, %s148
          %s150 = smul.u32 16, %s13
        $region28: #{tpu_custom_call.1} parent=23 // pred_fallthru
          _
      $region24: #{tpu_custom_call.1} parent=5 // pred_fallthru
        _
      %p151 = scmp.le.s32.totalorder 1, %s13
      %p152 = scmp.lt.s32.totalorder %s13, 3
      %p153 = pnand %p151, %p152
      %p154 = pneg %p153
      // Predicated region
      $region29: #{tpu_custom_call.1} parent=5 // pred_check
        _
      $region30: #{tpu_custom_call.1} parent=5 // pred_check_branch
        %156 = sbr.rel (%p153) target = $region32
      $region31: #{tpu_custom_call.1} parent=5 // pred_region
        %s157 = ssub.s32 %s13, 1
        // Predicated region
        $region33: #{tpu_custom_call.1} parent=31 // pred_check
          %p158 = pneg %p60
        $region34: #{tpu_custom_call.1} parent=31 // pred_check_branch
          %160 = sbr.rel (%p158) target = $region36
        $region35: #{tpu_custom_call.1} parent=31 // pred_region
          %161 = dma.done [#allocation3], 768
        $region36: #{tpu_custom_call.1} parent=31 // pred_fallthru
          _
        %s162 = smul.u32 16, %s18
        %p163 = scmp.lt.s32.totalorder %s162, 31
        %s164 = scalar_select %p163, %s162, 31
        %s165 = smul.addr %s164, 8
        %s166 = scalar_lea.vmem %s0, %s165
        %p167 = pneg %p39
        %p168 = pneg %p36
        %p169 = pneg %p60
        %p170 = pneg %p57
        %p171 = pneg %p81
        %p172 = pneg %p78
        %p173 = pneg %p107
        %p174 = pneg %p104
        %s175 = sand.u32 %s94, 1
        %s176 = scalar_lea.sflag [#allocation4], %s175
        %s177 = sand.u32 %s94, 1
        %s178 = smul.addr %s177, 128
        %s179 = scalar_lea.vmem [#allocation5], %s178
        %s180 = smul.u32 16, %s18
        %p181 = scmp.lt.s32.totalorder %s180, 31
        %s182 = scalar_select %p181, %s180, 31
        %s183 = smul.addr %s182, 8
        %s184 = scalar_lea.vmem %s0, %s183
        %s185 = smul.u32 16, %s18
        %s186 = smul.u32 16, %s18
        %v187 = vld [vmem:[%s184] sm:$0xff]
        %v188 = vld [vmem:[%s184 + $0x8] sm:$0xff]
        %v189 = vld [vmem:[%s184 + $0x10] sm:$0xff]
        %v190 = vld [vmem:[%s184 + $0x18] sm:$0xff]
        %v191 = vld [vmem:[%s184 + $0x20] sm:$0xff]
        %v192 = vld [vmem:[%s184 + $0x28] sm:$0xff]
        %v193 = vld [vmem:[%s184 + $0x30] sm:$0xff]
        %v194 = vld [vmem:[%s184 + $0x38] sm:$0xff]
        %v195 = vld [vmem:[%s184 + $0x40] sm:$0xff]
        %v196 = vld [vmem:[%s184 + $0x48] sm:$0xff]
        %v197 = vld [vmem:[%s184 + $0x50] sm:$0xff]
        %v198 = vld [vmem:[%s184 + $0x58] sm:$0xff]
        %v199 = vld [vmem:[%s184 + $0x60] sm:$0xff]
        %v200 = vld [vmem:[%s184 + $0x68] sm:$0xff]
        %v201 = vld [vmem:[%s184 + $0x70] sm:$0xff]
        %v202 = vld [vmem:[%s184 + $0x78] sm:$0xff]
        %219 = vrot.lane.b32.xlu0 %v187, 32
        %v220 = vpop.permute.xlu0 %219
        %221 = vrot.lane.b32.xlu0 %v188, 32
        %v222 = vpop.permute.xlu0 %221
        %223 = vrot.lane.b32.xlu0 %v189, 32
        %v224 = vpop.permute.xlu0 %223
        %225 = vrot.lane.b32.xlu0 %v190, 32
        %v226 = vpop.permute.xlu0 %225
        %227 = vrot.lane.b32.xlu0 %v191, 32
        %v228 = vpop.permute.xlu0 %227
        %229 = vrot.lane.b32.xlu0 %v192, 32
        %v230 = vpop.permute.xlu0 %229
        %231 = vrot.lane.b32.xlu0 %v193, 32
        %v232 = vpop.permute.xlu0 %231
        %233 = vrot.lane.b32.xlu0 %v194, 32
        %v234 = vpop.permute.xlu0 %233
        %235 = vrot.lane.b32.xlu0 %v195, 32
        %v236 = vpop.permute.xlu0 %235
        %237 = vrot.lane.b32.xlu0 %v196, 32
        %v238 = vpop.permute.xlu0 %237
        %239 = vrot.lane.b32.xlu0 %v197, 32
        %v240 = vpop.permute.xlu0 %239
        %241 = vrot.lane.b32.xlu0 %v198, 32
        %v242 = vpop.permute.xlu0 %241
        %243 = vrot.lane.b32.xlu0 %v199, 32
        %v244 = vpop.permute.xlu0 %243
        %245 = vrot.lane.b32.xlu0 %v200, 32
        %v246 = vpop.permute.xlu0 %245
        %247 = vrot.lane.b32.xlu0 %v201, 32
        %v248 = vpop.permute.xlu0 %247
        %249 = vrot.lane.b32.xlu0 %v202, 32
        %v250 = vpop.permute.xlu0 %249
        %267 = vrot.lane.b32.xlu0 %v187, 64
        %v268 = vpop.permute.xlu0 %267
        %269 = vrot.lane.b32.xlu0 %v188, 64
        %v270 = vpop.permute.xlu0 %269
        %271 = vrot.lane.b32.xlu0 %v189, 64
        %v272 = vpop.permute.xlu0 %271
        %273 = vrot.lane.b32.xlu0 %v190, 64
        %v274 = vpop.permute.xlu0 %273
        %275 = vrot.lane.b32.xlu0 %v191, 64
        %v276 = vpop.permute.xlu0 %275
        %277 = vrot.lane.b32.xlu0 %v192, 64
        %v278 = vpop.permute.xlu0 %277
        %279 = vrot.lane.b32.xlu0 %v193, 64
        %v280 = vpop.permute.xlu0 %279
        %281 = vrot.lane.b32.xlu0 %v194, 64
        %v282 = vpop.permute.xlu0 %281
        %283 = vrot.lane.b32.xlu0 %v195, 64
        %v284 = vpop.permute.xlu0 %283
        %285 = vrot.lane.b32.xlu0 %v196, 64
        %v286 = vpop.permute.xlu0 %285
        %287 = vrot.lane.b32.xlu0 %v197, 64
        %v288 = vpop.permute.xlu0 %287
        %289 = vrot.lane.b32.xlu0 %v198, 64
        %v290 = vpop.permute.xlu0 %289
        %291 = vrot.lane.b32.xlu0 %v199, 64
        %v292 = vpop.permute.xlu0 %291
        %293 = vrot.lane.b32.xlu0 %v200, 64
        %v294 = vpop.permute.xlu0 %293
        %295 = vrot.lane.b32.xlu0 %v201, 64
        %v296 = vpop.permute.xlu0 %295
        %297 = vrot.lane.b32.xlu0 %v202, 64
        %v298 = vpop.permute.xlu0 %297
        %315 = vrot.lane.b32.xlu0 %v187, 96
        %v316 = vpop.permute.xlu0 %315
        %317 = vrot.lane.b32.xlu0 %v188, 96
        %v318 = vpop.permute.xlu0 %317
        %319 = vrot.lane.b32.xlu0 %v189, 96
        %v320 = vpop.permute.xlu0 %319
        %321 = vrot.lane.b32.xlu0 %v190, 96
        %v322 = vpop.permute.xlu0 %321
        %323 = vrot.lane.b32.xlu0 %v191, 96
        %v324 = vpop.permute.xlu0 %323
        %325 = vrot.lane.b32.xlu0 %v192, 96
        %v326 = vpop.permute.xlu0 %325
        %327 = vrot.lane.b32.xlu0 %v193, 96
        %v328 = vpop.permute.xlu0 %327
        %329 = vrot.lane.b32.xlu0 %v194, 96
        %v330 = vpop.permute.xlu0 %329
        %331 = vrot.lane.b32.xlu0 %v195, 96
        %v332 = vpop.permute.xlu0 %331
        %333 = vrot.lane.b32.xlu0 %v196, 96
        %v334 = vpop.permute.xlu0 %333
        %335 = vrot.lane.b32.xlu0 %v197, 96
        %v336 = vpop.permute.xlu0 %335
        %337 = vrot.lane.b32.xlu0 %v198, 96
        %v338 = vpop.permute.xlu0 %337
        %339 = vrot.lane.b32.xlu0 %v199, 96
        %v340 = vpop.permute.xlu0 %339
        %341 = vrot.lane.b32.xlu0 %v200, 96
        %v342 = vpop.permute.xlu0 %341
        %343 = vrot.lane.b32.xlu0 %v201, 96
        %v344 = vpop.permute.xlu0 %343
        %345 = vrot.lane.b32.xlu0 %v202, 96
        %v346 = vpop.permute.xlu0 %345
        %vm363 = vcmask 261120
        %v364 = vsel %vm363, %v187, %v220
        %v365 = vsel %vm363, %v188, %v222
        %v366 = vsel %vm363, %v189, %v224
        %v367 = vsel %vm363, %v190, %v226
        %v368 = vsel %vm363, %v191, %v228
        %v369 = vsel %vm363, %v192, %v230
        %v370 = vsel %vm363, %v193, %v232
        %v371 = vsel %vm363, %v194, %v234
        %v372 = vsel %vm363, %v195, %v236
        %v373 = vsel %vm363, %v196, %v238
        %v374 = vsel %vm363, %v197, %v240
        %v375 = vsel %vm363, %v198, %v242
        %v376 = vsel %vm363, %v199, %v244
        %v377 = vsel %vm363, %v200, %v246
        %v378 = vsel %vm363, %v201, %v248
        %v379 = vsel %vm363, %v202, %v250
        %vm380 = vcmask 523264
        %v381 = vsel %vm380, %v364, %v268
        %v382 = vsel %vm380, %v365, %v270
        %v383 = vsel %vm380, %v366, %v272
        %v384 = vsel %vm380, %v367, %v274
        %v385 = vsel %vm380, %v368, %v276
        %v386 = vsel %vm380, %v369, %v278
        %v387 = vsel %vm380, %v370, %v280
        %v388 = vsel %vm380, %v371, %v282
        %v389 = vsel %vm380, %v372, %v284
        %v390 = vsel %vm380, %v373, %v286
        %v391 = vsel %vm380, %v374, %v288
        %v392 = vsel %vm380, %v375, %v290
        %v393 = vsel %vm380, %v376, %v292
        %v394 = vsel %vm380, %v377, %v294
        %v395 = vsel %vm380, %v378, %v296
        %v396 = vsel %vm380, %v379, %v298
        %vm397 = vcmask 785408
        %v398 = vsel %vm397, %v381, %v316
        %v399 = vsel %vm397, %v382, %v318
        %v400 = vsel %vm397, %v383, %v320
        %v401 = vsel %vm397, %v384, %v322
        %v402 = vsel %vm397, %v385, %v324
        %v403 = vsel %vm397, %v386, %v326
        %v404 = vsel %vm397, %v387, %v328
        %v405 = vsel %vm397, %v388, %v330
        %v406 = vsel %vm397, %v389, %v332
        %v407 = vsel %vm397, %v390, %v334
        %v408 = vsel %vm397, %v391, %v336
        %v409 = vsel %vm397, %v392, %v338
        %v410 = vsel %vm397, %v393, %v340
        %v411 = vsel %vm397, %v394, %v342
        %v412 = vsel %vm397, %v395, %v344
        %v413 = vsel %vm397, %v396, %v346
        %v414 = vld [vmem:[#allocation2] ss:$8 sm:$0x7]
        %v416 = vlaneseq
        %v417 = vshrl.u32 %v416, 7
        %v418 = vsub.s32 0, %v417
        %v419 = vrot.slane %v414, %v418
        %v420 = vlaneseq
        %v421 = vshrl.u32 %v420, 7
        %v422 = vsub.s32 1, %v421
        %v423 = vrot.slane %v414, %v422
        %v424 = vlaneseq
        %v425 = vshrl.u32 %v424, 7
        %v426 = vsub.s32 2, %v425
        %v427 = vrot.slane %v414, %v426
        %vm431 = vcmp.ge.f32.partialorder %v398, %v419
        %vm432 = vcmp.ge.f32.partialorder %v398, %v423
        %vm433 = vcmp.ge.f32.partialorder %v398, %v427
        %vm434 = vcmp.ge.f32.partialorder %v399, %v419
        %vm435 = vcmp.ge.f32.partialorder %v399, %v423
        %vm436 = vcmp.ge.f32.partialorder %v399, %v427
        %vm437 = vcmp.ge.f32.partialorder %v400, %v419
        %vm438 = vcmp.ge.f32.partialorder %v400, %v423
        %vm439 = vcmp.ge.f32.partialorder %v400, %v427
        %vm440 = vcmp.ge.f32.partialorder %v401, %v419
        %vm441 = vcmp.ge.f32.partialorder %v401, %v423
        %vm442 = vcmp.ge.f32.partialorder %v401, %v427
        %vm443 = vcmp.ge.f32.partialorder %v402, %v419
        %vm444 = vcmp.ge.f32.partialorder %v402, %v423
        %vm445 = vcmp.ge.f32.partialorder %v402, %v427
        %vm446 = vcmp.ge.f32.partialorder %v403, %v419
        %vm447 = vcmp.ge.f32.partialorder %v403, %v423
        %vm448 = vcmp.ge.f32.partialorder %v403, %v427
        %vm449 = vcmp.ge.f32.partialorder %v404, %v419
        %vm450 = vcmp.ge.f32.partialorder %v404, %v423
        %vm451 = vcmp.ge.f32.partialorder %v404, %v427
        %vm452 = vcmp.ge.f32.partialorder %v405, %v419
        %vm453 = vcmp.ge.f32.partialorder %v405, %v423
        %vm454 = vcmp.ge.f32.partialorder %v405, %v427
        %vm455 = vcmp.ge.f32.partialorder %v406, %v419
        %vm456 = vcmp.ge.f32.partialorder %v406, %v423
        %vm457 = vcmp.ge.f32.partialorder %v406, %v427
        %vm458 = vcmp.ge.f32.partialorder %v407, %v419
        %vm459 = vcmp.ge.f32.partialorder %v407, %v423
        %vm460 = vcmp.ge.f32.partialorder %v407, %v427
        %vm461 = vcmp.ge.f32.partialorder %v408, %v419
        %vm462 = vcmp.ge.f32.partialorder %v408, %v423
        %vm463 = vcmp.ge.f32.partialorder %v408, %v427
        %vm464 = vcmp.ge.f32.partialorder %v409, %v419
        %vm465 = vcmp.ge.f32.partialorder %v409, %v423
        %vm466 = vcmp.ge.f32.partialorder %v409, %v427
        %vm467 = vcmp.ge.f32.partialorder %v410, %v419
        %vm468 = vcmp.ge.f32.partialorder %v410, %v423
        %vm469 = vcmp.ge.f32.partialorder %v410, %v427
        %vm470 = vcmp.ge.f32.partialorder %v411, %v419
        %vm471 = vcmp.ge.f32.partialorder %v411, %v423
        %vm472 = vcmp.ge.f32.partialorder %v411, %v427
        %vm473 = vcmp.ge.f32.partialorder %v412, %v419
        %vm474 = vcmp.ge.f32.partialorder %v412, %v423
        %vm475 = vcmp.ge.f32.partialorder %v412, %v427
        %vm476 = vcmp.ge.f32.partialorder %v413, %v419
        %vm477 = vcmp.ge.f32.partialorder %v413, %v423
        %vm478 = vcmp.ge.f32.partialorder %v413, %v427
        %s479 = scalar_lea.vmem [#allocation2], 1
        %v480 = vld [vmem:[%s479] ss:$8 sm:$0x7]
        %v482 = vlaneseq
        %v483 = vshrl.u32 %v482, 7
        %v484 = vsub.s32 0, %v483
        %v485 = vrot.slane %v480, %v484
        %v486 = vlaneseq
        %v487 = vshrl.u32 %v486, 7
        %v488 = vsub.s32 1, %v487
        %v489 = vrot.slane %v480, %v488
        %v490 = vlaneseq
        %v491 = vshrl.u32 %v490, 7
        %v492 = vsub.s32 2, %v491
        %v493 = vrot.slane %v480, %v492
        %vm497 = vcmp.lt.f32.partialorder %v398, %v485
        %vm498 = vcmp.lt.f32.partialorder %v398, %v489
        %vm499 = vcmp.lt.f32.partialorder %v398, %v493
        %vm500 = vcmp.lt.f32.partialorder %v399, %v485
        %vm501 = vcmp.lt.f32.partialorder %v399, %v489
        %vm502 = vcmp.lt.f32.partialorder %v399, %v493
        %vm503 = vcmp.lt.f32.partialorder %v400, %v485
        %vm504 = vcmp.lt.f32.partialorder %v400, %v489
        %vm505 = vcmp.lt.f32.partialorder %v400, %v493
        %vm506 = vcmp.lt.f32.partialorder %v401, %v485
        %vm507 = vcmp.lt.f32.partialorder %v401, %v489
        %vm508 = vcmp.lt.f32.partialorder %v401, %v493
        %vm509 = vcmp.lt.f32.partialorder %v402, %v485
        %vm510 = vcmp.lt.f32.partialorder %v402, %v489
        %vm511 = vcmp.lt.f32.partialorder %v402, %v493
        %vm512 = vcmp.lt.f32.partialorder %v403, %v485
        %vm513 = vcmp.lt.f32.partialorder %v403, %v489
        %vm514 = vcmp.lt.f32.partialorder %v403, %v493
        %vm515 = vcmp.lt.f32.partialorder %v404, %v485
        %vm516 = vcmp.lt.f32.partialorder %v404, %v489
        %vm517 = vcmp.lt.f32.partialorder %v404, %v493
        %vm518 = vcmp.lt.f32.partialorder %v405, %v485
        %vm519 = vcmp.lt.f32.partialorder %v405, %v489
        %vm520 = vcmp.lt.f32.partialorder %v405, %v493
        %vm521 = vcmp.lt.f32.partialorder %v406, %v485
        %vm522 = vcmp.lt.f32.partialorder %v406, %v489
        %vm523 = vcmp.lt.f32.partialorder %v406, %v493
        %vm524 = vcmp.lt.f32.partialorder %v407, %v485
        %vm525 = vcmp.lt.f32.partialorder %v407, %v489
        %vm526 = vcmp.lt.f32.partialorder %v407, %v493
        %vm527 = vcmp.lt.f32.partialorder %v408, %v485
        %vm528 = vcmp.lt.f32.partialorder %v408, %v489
        %vm529 = vcmp.lt.f32.partialorder %v408, %v493
        %vm530 = vcmp.lt.f32.partialorder %v409, %v485
        %vm531 = vcmp.lt.f32.partialorder %v409, %v489
        %vm532 = vcmp.lt.f32.partialorder %v409, %v493
        %vm533 = vcmp.lt.f32.partialorder %v410, %v485
        %vm534 = vcmp.lt.f32.partialorder %v410, %v489
        %vm535 = vcmp.lt.f32.partialorder %v410, %v493
        %vm536 = vcmp.lt.f32.partialorder %v411, %v485
        %vm537 = vcmp.lt.f32.partialorder %v411, %v489
        %vm538 = vcmp.lt.f32.partialorder %v411, %v493
        %vm539 = vcmp.lt.f32.partialorder %v412, %v485
        %vm540 = vcmp.lt.f32.partialorder %v412, %v489
        %vm541 = vcmp.lt.f32.partialorder %v412, %v493
        %vm542 = vcmp.lt.f32.partialorder %v413, %v485
        %vm543 = vcmp.lt.f32.partialorder %v413, %v489
        %vm544 = vcmp.lt.f32.partialorder %v413, %v493
        %vm545 = vmand %vm431, %vm497
        %vm546 = vmand %vm432, %vm498
        %vm547 = vmand %vm433, %vm499
        %vm548 = vmand %vm434, %vm500
        %vm549 = vmand %vm435, %vm501
        %vm550 = vmand %vm436, %vm502
        %vm551 = vmand %vm437, %vm503
        %vm552 = vmand %vm438, %vm504
        %vm553 = vmand %vm439, %vm505
        %vm554 = vmand %vm440, %vm506
        %vm555 = vmand %vm441, %vm507
        %vm556 = vmand %vm442, %vm508
        %vm557 = vmand %vm443, %vm509
        %vm558 = vmand %vm444, %vm510
        %vm559 = vmand %vm445, %vm511
        %vm560 = vmand %vm446, %vm512
        %vm561 = vmand %vm447, %vm513
        %vm562 = vmand %vm448, %vm514
        %vm563 = vmand %vm449, %vm515
        %vm564 = vmand %vm450, %vm516
        %vm565 = vmand %vm451, %vm517
        %vm566 = vmand %vm452, %vm518
        %vm567 = vmand %vm453, %vm519
        %vm568 = vmand %vm454, %vm520
        %vm569 = vmand %vm455, %vm521
        %vm570 = vmand %vm456, %vm522
        %vm571 = vmand %vm457, %vm523
        %vm572 = vmand %vm458, %vm524
        %vm573 = vmand %vm459, %vm525
        %vm574 = vmand %vm460, %vm526
        %vm575 = vmand %vm461, %vm527
        %vm576 = vmand %vm462, %vm528
        %vm577 = vmand %vm463, %vm529
        %vm578 = vmand %vm464, %vm530
        %vm579 = vmand %vm465, %vm531
        %vm580 = vmand %vm466, %vm532
        %vm581 = vmand %vm467, %vm533
        %vm582 = vmand %vm468, %vm534
        %vm583 = vmand %vm469, %vm535
        %vm584 = vmand %vm470, %vm536
        %vm585 = vmand %vm471, %vm537
        %vm586 = vmand %vm472, %vm538
        %vm587 = vmand %vm473, %vm539
        %vm588 = vmand %vm474, %vm540
        %vm589 = vmand %vm475, %vm541
        %vm590 = vmand %vm476, %vm542
        %vm591 = vmand %vm477, %vm543
        %vm592 = vmand %vm478, %vm544
        %v593 = vsel %vm545, 1, 0
        %v594 = vsel %vm546, 1, 0
        %v595 = vsel %vm547, 1, 0
        %v596 = vsel %vm548, 1, 0
        %v597 = vsel %vm549, 1, 0
        %v598 = vsel %vm550, 1, 0
        %v599 = vsel %vm551, 1, 0
        %v600 = vsel %vm552, 1, 0
        %v601 = vsel %vm553, 1, 0
        %v602 = vsel %vm554, 1, 0
        %v603 = vsel %vm555, 1, 0
        %v604 = vsel %vm556, 1, 0
        %v605 = vsel %vm557, 1, 0
        %v606 = vsel %vm558, 1, 0
        %v607 = vsel %vm559, 1, 0
        %v608 = vsel %vm560, 1, 0
        %v609 = vsel %vm561, 1, 0
        %v610 = vsel %vm562, 1, 0
        %v611 = vsel %vm563, 1, 0
        %v612 = vsel %vm564, 1, 0
        %v613 = vsel %vm565, 1, 0
        %v614 = vsel %vm566, 1, 0
        %v615 = vsel %vm567, 1, 0
        %v616 = vsel %vm568, 1, 0
        %v617 = vsel %vm569, 1, 0
        %v618 = vsel %vm570, 1, 0
        %v619 = vsel %vm571, 1, 0
        %v620 = vsel %vm572, 1, 0
        %v621 = vsel %vm573, 1, 0
        %v622 = vsel %vm574, 1, 0
        %v623 = vsel %vm575, 1, 0
        %v624 = vsel %vm576, 1, 0
        %v625 = vsel %vm577, 1, 0
        %v626 = vsel %vm578, 1, 0
        %v627 = vsel %vm579, 1, 0
        %v628 = vsel %vm580, 1, 0
        %v629 = vsel %vm581, 1, 0
        %v630 = vsel %vm582, 1, 0
        %v631 = vsel %vm583, 1, 0
        %v632 = vsel %vm584, 1, 0
        %v633 = vsel %vm585, 1, 0
        %v634 = vsel %vm586, 1, 0
        %v635 = vsel %vm587, 1, 0
        %v636 = vsel %vm588, 1, 0
        %v637 = vsel %vm589, 1, 0
        %v638 = vsel %vm590, 1, 0
        %v639 = vsel %vm591, 1, 0
        %v640 = vsel %vm592, 1, 0
        %v641 = vcvt.s32.f32 %v593
        %v642 = vcvt.s32.f32 %v594
        %v643 = vcvt.s32.f32 %v595
        %v644 = vcvt.s32.f32 %v596
        %v645 = vcvt.s32.f32 %v597
        %v646 = vcvt.s32.f32 %v598
        %v647 = vcvt.s32.f32 %v599
        %v648 = vcvt.s32.f32 %v600
        %v649 = vcvt.s32.f32 %v601
        %v650 = vcvt.s32.f32 %v602
        %v651 = vcvt.s32.f32 %v603
        %v652 = vcvt.s32.f32 %v604
        %v653 = vcvt.s32.f32 %v605
        %v654 = vcvt.s32.f32 %v606
        %v655 = vcvt.s32.f32 %v607
        %v656 = vcvt.s32.f32 %v608
        %v657 = vcvt.s32.f32 %v609
        %v658 = vcvt.s32.f32 %v610
        %v659 = vcvt.s32.f32 %v611
        %v660 = vcvt.s32.f32 %v612
        %v661 = vcvt.s32.f32 %v613
        %v662 = vcvt.s32.f32 %v614
        %v663 = vcvt.s32.f32 %v615
        %v664 = vcvt.s32.f32 %v616
        %v665 = vcvt.s32.f32 %v617
        %v666 = vcvt.s32.f32 %v618
        %v667 = vcvt.s32.f32 %v619
        %v668 = vcvt.s32.f32 %v620
        %v669 = vcvt.s32.f32 %v621
        %v670 = vcvt.s32.f32 %v622
        %v671 = vcvt.s32.f32 %v623
        %v672 = vcvt.s32.f32 %v624
        %v673 = vcvt.s32.f32 %v625
        %v674 = vcvt.s32.f32 %v626
        %v675 = vcvt.s32.f32 %v627
        %v676 = vcvt.s32.f32 %v628
        %v677 = vcvt.s32.f32 %v629
        %v678 = vcvt.s32.f32 %v630
        %v679 = vcvt.s32.f32 %v631
        %v680 = vcvt.s32.f32 %v632
        %v681 = vcvt.s32.f32 %v633
        %v682 = vcvt.s32.f32 %v634
        %v683 = vcvt.s32.f32 %v635
        %v684 = vcvt.s32.f32 %v636
        %v685 = vcvt.s32.f32 %v637
        %v686 = vcvt.s32.f32 %v638
        %v687 = vcvt.s32.f32 %v639
        %v688 = vcvt.s32.f32 %v640
        %s689 = scalar_lea.vmem [#allocation2], 2
        %v690 = vld [vmem:[%s689] ss:$8 sm:$0x7]
        %s691 = scalar_lea.vmem [#allocation2], 3
        %v692 = vld [vmem:[%s691] ss:$8 sm:$0x7]
        %s693 = scalar_lea.vmem [#allocation2], 4
        %v694 = vld [vmem:[%s693] ss:$8 sm:$0x7]
        %s695 = scalar_lea.vmem [#allocation2], 5
        %v696 = vld [vmem:[%s695] ss:$8 sm:$0x7]
        %697 = vrot.lane.b32.xlu0 %v641, 96
        %v698 = vpop.permute.xlu0 %697
        %699 = vrot.lane.b32.xlu0 %v644, 96
        %v700 = vpop.permute.xlu0 %699
        %701 = vrot.lane.b32.xlu0 %v647, 96
        %v702 = vpop.permute.xlu0 %701
        %703 = vrot.lane.b32.xlu0 %v650, 96
        %v704 = vpop.permute.xlu0 %703
        %705 = vrot.lane.b32.xlu0 %v653, 96
        %v706 = vpop.permute.xlu0 %705
        %707 = vrot.lane.b32.xlu0 %v656, 96
        %v708 = vpop.permute.xlu0 %707
        %709 = vrot.lane.b32.xlu0 %v659, 96
        %v710 = vpop.permute.xlu0 %709
        %711 = vrot.lane.b32.xlu0 %v662, 96
        %v712 = vpop.permute.xlu0 %711
        %713 = vrot.lane.b32.xlu0 %v665, 96
        %v714 = vpop.permute.xlu0 %713
        %715 = vrot.lane.b32.xlu0 %v668, 96
        %v716 = vpop.permute.xlu0 %715
        %717 = vrot.lane.b32.xlu0 %v671, 96
        %v718 = vpop.permute.xlu0 %717
        %719 = vrot.lane.b32.xlu0 %v674, 96
        %v720 = vpop.permute.xlu0 %719
        %721 = vrot.lane.b32.xlu0 %v677, 96
        %v722 = vpop.permute.xlu0 %721
        %723 = vrot.lane.b32.xlu0 %v680, 96
        %v724 = vpop.permute.xlu0 %723
        %725 = vrot.lane.b32.xlu0 %v683, 96
        %v726 = vpop.permute.xlu0 %725
        %727 = vrot.lane.b32.xlu0 %v686, 96
        %v728 = vpop.permute.xlu0 %727
        %729 = vrot.lane.b32.xlu0 %v642, 96
        %v730 = vpop.permute.xlu0 %729
        %731 = vrot.lane.b32.xlu0 %v645, 96
        %v732 = vpop.permute.xlu0 %731
        %733 = vrot.lane.b32.xlu0 %v648, 96
        %v734 = vpop.permute.xlu0 %733
        %735 = vrot.lane.b32.xlu0 %v651, 96
        %v736 = vpop.permute.xlu0 %735
        %737 = vrot.lane.b32.xlu0 %v654, 96
        %v738 = vpop.permute.xlu0 %737
        %739 = vrot.lane.b32.xlu0 %v657, 96
        %v740 = vpop.permute.xlu0 %739
        %741 = vrot.lane.b32.xlu0 %v660, 96
        %v742 = vpop.permute.xlu0 %741
        %743 = vrot.lane.b32.xlu0 %v663, 96
        %v744 = vpop.permute.xlu0 %743
        %745 = vrot.lane.b32.xlu0 %v666, 96
        %v746 = vpop.permute.xlu0 %745
        %747 = vrot.lane.b32.xlu0 %v669, 96
        %v748 = vpop.permute.xlu0 %747
        %749 = vrot.lane.b32.xlu0 %v672, 96
        %v750 = vpop.permute.xlu0 %749
        %751 = vrot.lane.b32.xlu0 %v675, 96
        %v752 = vpop.permute.xlu0 %751
        %753 = vrot.lane.b32.xlu0 %v678, 96
        %v754 = vpop.permute.xlu0 %753
        %755 = vrot.lane.b32.xlu0 %v681, 96
        %v756 = vpop.permute.xlu0 %755
        %757 = vrot.lane.b32.xlu0 %v684, 96
        %v758 = vpop.permute.xlu0 %757
        %759 = vrot.lane.b32.xlu0 %v687, 96
        %v760 = vpop.permute.xlu0 %759
        %761 = vrot.lane.b32.xlu0 %v643, 96
        %v762 = vpop.permute.xlu0 %761
        %763 = vrot.lane.b32.xlu0 %v646, 96
        %v764 = vpop.permute.xlu0 %763
        %765 = vrot.lane.b32.xlu0 %v649, 96
        %v766 = vpop.permute.xlu0 %765
        %767 = vrot.lane.b32.xlu0 %v652, 96
        %v768 = vpop.permute.xlu0 %767
        %769 = vrot.lane.b32.xlu0 %v655, 96
        %v770 = vpop.permute.xlu0 %769
        %771 = vrot.lane.b32.xlu0 %v658, 96
        %v772 = vpop.permute.xlu0 %771
        %773 = vrot.lane.b32.xlu0 %v661, 96
        %v774 = vpop.permute.xlu0 %773
        %775 = vrot.lane.b32.xlu0 %v664, 96
        %v776 = vpop.permute.xlu0 %775
        %777 = vrot.lane.b32.xlu0 %v667, 96
        %v778 = vpop.permute.xlu0 %777
        %779 = vrot.lane.b32.xlu0 %v670, 96
        %v780 = vpop.permute.xlu0 %779
        %781 = vrot.lane.b32.xlu0 %v673, 96
        %v782 = vpop.permute.xlu0 %781
        %783 = vrot.lane.b32.xlu0 %v676, 96
        %v784 = vpop.permute.xlu0 %783
        %785 = vrot.lane.b32.xlu0 %v679, 96
        %v786 = vpop.permute.xlu0 %785
        %787 = vrot.lane.b32.xlu0 %v682, 96
        %v788 = vpop.permute.xlu0 %787
        %789 = vrot.lane.b32.xlu0 %v685, 96
        %v790 = vpop.permute.xlu0 %789
        %791 = vrot.lane.b32.xlu0 %v688, 96
        %v792 = vpop.permute.xlu0 %791
        %v793 = vlaneseq
        %v794 = vand.u32 %v793, 127
        %vm795 = vcmp.lt.s32.totalorder %v794, 96
        %v796 = vsel %vm795, %v730, %v762
        %v797 = vsel %vm795, %v732, %v764
        %v798 = vsel %vm795, %v734, %v766
        %v799 = vsel %vm795, %v736, %v768
        %v800 = vsel %vm795, %v738, %v770
        %v801 = vsel %vm795, %v740, %v772
        %v802 = vsel %vm795, %v742, %v774
        %v803 = vsel %vm795, %v744, %v776
        %v804 = vsel %vm795, %v746, %v778
        %v805 = vsel %vm795, %v748, %v780
        %v806 = vsel %vm795, %v750, %v782
        %v807 = vsel %vm795, %v752, %v784
        %v808 = vsel %vm795, %v754, %v786
        %v809 = vsel %vm795, %v756, %v788
        %v810 = vsel %vm795, %v758, %v790
        %v811 = vsel %vm795, %v760, %v792
        %v812 = vsel %vm795, %v698, %v730
        %v813 = vsel %vm795, %v700, %v732
        %v814 = vsel %vm795, %v702, %v734
        %v815 = vsel %vm795, %v704, %v736
        %v816 = vsel %vm795, %v706, %v738
        %v817 = vsel %vm795, %v708, %v740
        %v818 = vsel %vm795, %v710, %v742
        %v819 = vsel %vm795, %v712, %v744
        %v820 = vsel %vm795, %v714, %v746
        %v821 = vsel %vm795, %v716, %v748
        %v822 = vsel %vm795, %v718, %v750
        %v823 = vsel %vm795, %v720, %v752
        %v824 = vsel %vm795, %v722, %v754
        %v825 = vsel %vm795, %v724, %v756
        %v826 = vsel %vm795, %v726, %v758
        %v827 = vsel %vm795, %v728, %v760
        %v828 = vsel %vm795, %v762, %v698
        %v829 = vsel %vm795, %v764, %v700
        %v830 = vsel %vm795, %v766, %v702
        %v831 = vsel %vm795, %v768, %v704
        %v832 = vsel %vm795, %v770, %v706
        %v833 = vsel %vm795, %v772, %v708
        %v834 = vsel %vm795, %v774, %v710
        %v835 = vsel %vm795, %v776, %v712
        %v836 = vsel %vm795, %v778, %v714
        %v837 = vsel %vm795, %v780, %v716
        %v838 = vsel %vm795, %v782, %v718
        %v839 = vsel %vm795, %v784, %v720
        %v840 = vsel %vm795, %v786, %v722
        %v841 = vsel %vm795, %v788, %v724
        %v842 = vsel %vm795, %v790, %v726
        %v843 = vsel %vm795, %v792, %v728
        %v845 = vlaneseq
        %v846 = vshrl.u32 %v845, 7
        %v847 = vsub.s32 0, %v846
        %v848 = vrot.slane %v690, %v847
        %v849 = vlaneseq
        %v850 = vshrl.u32 %v849, 7
        %v851 = vsub.s32 1, %v850
        %v852 = vrot.slane %v690, %v851
        %v853 = vlaneseq
        %v854 = vshrl.u32 %v853, 7
        %v855 = vsub.s32 2, %v854
        %v856 = vrot.slane %v690, %v855
        %v860 = vsub.f32 %v398, %v848
        %v861 = vsub.f32 %v398, %v852
        %v862 = vsub.f32 %v398, %v856
        %v863 = vsub.f32 %v399, %v848
        %v864 = vsub.f32 %v399, %v852
        %v865 = vsub.f32 %v399, %v856
        %v866 = vsub.f32 %v400, %v848
        %v867 = vsub.f32 %v400, %v852
        %v868 = vsub.f32 %v400, %v856
        %v869 = vsub.f32 %v401, %v848
        %v870 = vsub.f32 %v401, %v852
        %v871 = vsub.f32 %v401, %v856
        %v872 = vsub.f32 %v402, %v848
        %v873 = vsub.f32 %v402, %v852
        %v874 = vsub.f32 %v402, %v856
        %v875 = vsub.f32 %v403, %v848
        %v876 = vsub.f32 %v403, %v852
        %v877 = vsub.f32 %v403, %v856
        %v878 = vsub.f32 %v404, %v848
        %v879 = vsub.f32 %v404, %v852
        %v880 = vsub.f32 %v404, %v856
        %v881 = vsub.f32 %v405, %v848
        %v882 = vsub.f32 %v405, %v852
        %v883 = vsub.f32 %v405, %v856
        %v884 = vsub.f32 %v406, %v848
        %v885 = vsub.f32 %v406, %v852
        %v886 = vsub.f32 %v406, %v856
        %v887 = vsub.f32 %v407, %v848
        %v888 = vsub.f32 %v407, %v852
        %v889 = vsub.f32 %v407, %v856
        %v890 = vsub.f32 %v408, %v848
        %v891 = vsub.f32 %v408, %v852
        %v892 = vsub.f32 %v408, %v856
        %v893 = vsub.f32 %v409, %v848
        %v894 = vsub.f32 %v409, %v852
        %v895 = vsub.f32 %v409, %v856
        %v896 = vsub.f32 %v410, %v848
        %v897 = vsub.f32 %v410, %v852
        %v898 = vsub.f32 %v410, %v856
        %v899 = vsub.f32 %v411, %v848
        %v900 = vsub.f32 %v411, %v852
        %v901 = vsub.f32 %v411, %v856
        %v902 = vsub.f32 %v412, %v848
        %v903 = vsub.f32 %v412, %v852
        %v904 = vsub.f32 %v412, %v856
        %v905 = vsub.f32 %v413, %v848
        %v906 = vsub.f32 %v413, %v852
        %v907 = vsub.f32 %v413, %v856
        %v909 = vlaneseq
        %v910 = vshrl.u32 %v909, 7
        %v911 = vsub.s32 0, %v910
        %v912 = vrot.slane %v692, %v911
        %v913 = vlaneseq
        %v914 = vshrl.u32 %v913, 7
        %v915 = vsub.s32 1, %v914
        %v916 = vrot.slane %v692, %v915
        %v917 = vlaneseq
        %v918 = vshrl.u32 %v917, 7
        %v919 = vsub.s32 2, %v918
        %v920 = vrot.slane %v692, %v919
        %v924 = vmul.f32 %v860, %v912
        %v925 = vmul.f32 %v861, %v916
        %v926 = vmul.f32 %v862, %v920
        %v927 = vmul.f32 %v863, %v912
        %v928 = vmul.f32 %v864, %v916
        %v929 = vmul.f32 %v865, %v920
        %v930 = vmul.f32 %v866, %v912
        %v931 = vmul.f32 %v867, %v916
        %v932 = vmul.f32 %v868, %v920
        %v933 = vmul.f32 %v869, %v912
        %v934 = vmul.f32 %v870, %v916
        %v935 = vmul.f32 %v871, %v920
        %v936 = vmul.f32 %v872, %v912
        %v937 = vmul.f32 %v873, %v916
        %v938 = vmul.f32 %v874, %v920
        %v939 = vmul.f32 %v875, %v912
        %v940 = vmul.f32 %v876, %v916
        %v941 = vmul.f32 %v877, %v920
        %v942 = vmul.f32 %v878, %v912
        %v943 = vmul.f32 %v879, %v916
        %v944 = vmul.f32 %v880, %v920
        %v945 = vmul.f32 %v881, %v912
        %v946 = vmul.f32 %v882, %v916
        %v947 = vmul.f32 %v883, %v920
        %v948 = vmul.f32 %v884, %v912
        %v949 = vmul.f32 %v885, %v916
        %v950 = vmul.f32 %v886, %v920
        %v951 = vmul.f32 %v887, %v912
        %v952 = vmul.f32 %v888, %v916
        %v953 = vmul.f32 %v889, %v920
        %v954 = vmul.f32 %v890, %v912
        %v955 = vmul.f32 %v891, %v916
        %v956 = vmul.f32 %v892, %v920
        %v957 = vmul.f32 %v893, %v912
        %v958 = vmul.f32 %v894, %v916
        %v959 = vmul.f32 %v895, %v920
        %v960 = vmul.f32 %v896, %v912
        %v961 = vmul.f32 %v897, %v916
        %v962 = vmul.f32 %v898, %v920
        %v963 = vmul.f32 %v899, %v912
        %v964 = vmul.f32 %v900, %v916
        %v965 = vmul.f32 %v901, %v920
        %v966 = vmul.f32 %v902, %v912
        %v967 = vmul.f32 %v903, %v916
        %v968 = vmul.f32 %v904, %v920
        %v969 = vmul.f32 %v905, %v912
        %v970 = vmul.f32 %v906, %v916
        %v971 = vmul.f32 %v907, %v920
        %v972 = vmul.f32 %v924, %v641
        %v973 = vmul.f32 %v925, %v642
        %v974 = vmul.f32 %v926, %v643
        %v975 = vmul.f32 %v927, %v644
        %v976 = vmul.f32 %v928, %v645
        %v977 = vmul.f32 %v929, %v646
        %v978 = vmul.f32 %v930, %v647
        %v979 = vmul.f32 %v931, %v648
        %v980 = vmul.f32 %v932, %v649
        %v981 = vmul.f32 %v933, %v650
        %v982 = vmul.f32 %v934, %v651
        %v983 = vmul.f32 %v935, %v652
        %v984 = vmul.f32 %v936, %v653
        %v985 = vmul.f32 %v937, %v654
        %v986 = vmul.f32 %v938, %v655
        %v987 = vmul.f32 %v939, %v656
        %v988 = vmul.f32 %v940, %v657
        %v989 = vmul.f32 %v941, %v658
        %v990 = vmul.f32 %v942, %v659
        %v991 = vmul.f32 %v943, %v660
        %v992 = vmul.f32 %v944, %v661
        %v993 = vmul.f32 %v945, %v662
        %v994 = vmul.f32 %v946, %v663
        %v995 = vmul.f32 %v947, %v664
        %v996 = vmul.f32 %v948, %v665
        %v997 = vmul.f32 %v949, %v666
        %v998 = vmul.f32 %v950, %v667
        %v999 = vmul.f32 %v951, %v668
        %v1000 = vmul.f32 %v952, %v669
        %v1001 = vmul.f32 %v953, %v670
        %v1002 = vmul.f32 %v954, %v671
        %v1003 = vmul.f32 %v955, %v672
        %v1004 = vmul.f32 %v956, %v673
        %v1005 = vmul.f32 %v957, %v674
        %v1006 = vmul.f32 %v958, %v675
        %v1007 = vmul.f32 %v959, %v676
        %v1008 = vmul.f32 %v960, %v677
        %v1009 = vmul.f32 %v961, %v678
        %v1010 = vmul.f32 %v962, %v679
        %v1011 = vmul.f32 %v963, %v680
        %v1012 = vmul.f32 %v964, %v681
        %v1013 = vmul.f32 %v965, %v682
        %v1014 = vmul.f32 %v966, %v683
        %v1015 = vmul.f32 %v967, %v684
        %v1016 = vmul.f32 %v968, %v685
        %v1017 = vmul.f32 %v969, %v686
        %v1018 = vmul.f32 %v970, %v687
        %v1019 = vmul.f32 %v971, %v688
        %v1021 = vlaneseq
        %v1022 = vshrl.u32 %v1021, 7
        %v1023 = vsub.s32 0, %v1022
        %v1024 = vrot.slane %v694, %v1023
        %v1025 = vlaneseq
        %v1026 = vshrl.u32 %v1025, 7
        %v1027 = vsub.s32 1, %v1026
        %v1028 = vrot.slane %v694, %v1027
        %v1029 = vlaneseq
        %v1030 = vshrl.u32 %v1029, 7
        %v1031 = vsub.s32 2, %v1030
        %v1032 = vrot.slane %v694, %v1031
        %v1036 = vsub.f32 %v1024, %v398
        %v1037 = vsub.f32 %v1028, %v398
        %v1038 = vsub.f32 %v1032, %v398
        %v1039 = vsub.f32 %v1024, %v399
        %v1040 = vsub.f32 %v1028, %v399
        %v1041 = vsub.f32 %v1032, %v399
        %v1042 = vsub.f32 %v1024, %v400
        %v1043 = vsub.f32 %v1028, %v400
        %v1044 = vsub.f32 %v1032, %v400
        %v1045 = vsub.f32 %v1024, %v401
        %v1046 = vsub.f32 %v1028, %v401
        %v1047 = vsub.f32 %v1032, %v401
        %v1048 = vsub.f32 %v1024, %v402
        %v1049 = vsub.f32 %v1028, %v402
        %v1050 = vsub.f32 %v1032, %v402
        %v1051 = vsub.f32 %v1024, %v403
        %v1052 = vsub.f32 %v1028, %v403
        %v1053 = vsub.f32 %v1032, %v403
        %v1054 = vsub.f32 %v1024, %v404
        %v1055 = vsub.f32 %v1028, %v404
        %v1056 = vsub.f32 %v1032, %v404
        %v1057 = vsub.f32 %v1024, %v405
        %v1058 = vsub.f32 %v1028, %v405
        %v1059 = vsub.f32 %v1032, %v405
        %v1060 = vsub.f32 %v1024, %v406
        %v1061 = vsub.f32 %v1028, %v406
        %v1062 = vsub.f32 %v1032, %v406
        %v1063 = vsub.f32 %v1024, %v407
        %v1064 = vsub.f32 %v1028, %v407
        %v1065 = vsub.f32 %v1032, %v407
        %v1066 = vsub.f32 %v1024, %v408
        %v1067 = vsub.f32 %v1028, %v408
        %v1068 = vsub.f32 %v1032, %v408
        %v1069 = vsub.f32 %v1024, %v409
        %v1070 = vsub.f32 %v1028, %v409
        %v1071 = vsub.f32 %v1032, %v409
        %v1072 = vsub.f32 %v1024, %v410
        %v1073 = vsub.f32 %v1028, %v410
        %v1074 = vsub.f32 %v1032, %v410
        %v1075 = vsub.f32 %v1024, %v411
        %v1076 = vsub.f32 %v1028, %v411
        %v1077 = vsub.f32 %v1032, %v411
        %v1078 = vsub.f32 %v1024, %v412
        %v1079 = vsub.f32 %v1028, %v412
        %v1080 = vsub.f32 %v1032, %v412
        %v1081 = vsub.f32 %v1024, %v413
        %v1082 = vsub.f32 %v1028, %v413
        %v1083 = vsub.f32 %v1032, %v413
        %v1085 = vlaneseq
        %v1086 = vshrl.u32 %v1085, 7
        %v1087 = vsub.s32 0, %v1086
        %v1088 = vrot.slane %v696, %v1087
        %v1089 = vlaneseq
        %v1090 = vshrl.u32 %v1089, 7
        %v1091 = vsub.s32 1, %v1090
        %v1092 = vrot.slane %v696, %v1091
        %v1093 = vlaneseq
        %v1094 = vshrl.u32 %v1093, 7
        %v1095 = vsub.s32 2, %v1094
        %v1096 = vrot.slane %v696, %v1095
        %v1100 = vmul.f32 %v1036, %v1088
        %v1101 = vmul.f32 %v1037, %v1092
        %v1102 = vmul.f32 %v1038, %v1096
        %v1103 = vmul.f32 %v1039, %v1088
        %v1104 = vmul.f32 %v1040, %v1092
        %v1105 = vmul.f32 %v1041, %v1096
        %v1106 = vmul.f32 %v1042, %v1088
        %v1107 = vmul.f32 %v1043, %v1092
        %v1108 = vmul.f32 %v1044, %v1096
        %v1109 = vmul.f32 %v1045, %v1088
        %v1110 = vmul.f32 %v1046, %v1092
        %v1111 = vmul.f32 %v1047, %v1096
        %v1112 = vmul.f32 %v1048, %v1088
        %v1113 = vmul.f32 %v1049, %v1092
        %v1114 = vmul.f32 %v1050, %v1096
        %v1115 = vmul.f32 %v1051, %v1088
        %v1116 = vmul.f32 %v1052, %v1092
        %v1117 = vmul.f32 %v1053, %v1096
        %v1118 = vmul.f32 %v1054, %v1088
        %v1119 = vmul.f32 %v1055, %v1092
        %v1120 = vmul.f32 %v1056, %v1096
        %v1121 = vmul.f32 %v1057, %v1088
        %v1122 = vmul.f32 %v1058, %v1092
        %v1123 = vmul.f32 %v1059, %v1096
        %v1124 = vmul.f32 %v1060, %v1088
        %v1125 = vmul.f32 %v1061, %v1092
        %v1126 = vmul.f32 %v1062, %v1096
        %v1127 = vmul.f32 %v1063, %v1088
        %v1128 = vmul.f32 %v1064, %v1092
        %v1129 = vmul.f32 %v1065, %v1096
        %v1130 = vmul.f32 %v1066, %v1088
        %v1131 = vmul.f32 %v1067, %v1092
        %v1132 = vmul.f32 %v1068, %v1096
        %v1133 = vmul.f32 %v1069, %v1088
        %v1134 = vmul.f32 %v1070, %v1092
        %v1135 = vmul.f32 %v1071, %v1096
        %v1136 = vmul.f32 %v1072, %v1088
        %v1137 = vmul.f32 %v1073, %v1092
        %v1138 = vmul.f32 %v1074, %v1096
        %v1139 = vmul.f32 %v1075, %v1088
        %v1140 = vmul.f32 %v1076, %v1092
        %v1141 = vmul.f32 %v1077, %v1096
        %v1142 = vmul.f32 %v1078, %v1088
        %v1143 = vmul.f32 %v1079, %v1092
        %v1144 = vmul.f32 %v1080, %v1096
        %v1145 = vmul.f32 %v1081, %v1088
        %v1146 = vmul.f32 %v1082, %v1092
        %v1147 = vmul.f32 %v1083, %v1096
        %v1148 = vmul.f32 %v1100, %v812
        %v1149 = vmul.f32 %v1101, %v796
        %v1150 = vmul.f32 %v1102, %v828
        %v1151 = vmul.f32 %v1103, %v813
        %v1152 = vmul.f32 %v1104, %v797
        %v1153 = vmul.f32 %v1105, %v829
        %v1154 = vmul.f32 %v1106, %v814
        %v1155 = vmul.f32 %v1107, %v798
        %v1156 = vmul.f32 %v1108, %v830
        %v1157 = vmul.f32 %v1109, %v815
        %v1158 = vmul.f32 %v1110, %v799
        %v1159 = vmul.f32 %v1111, %v831
        %v1160 = vmul.f32 %v1112, %v816
        %v1161 = vmul.f32 %v1113, %v800
        %v1162 = vmul.f32 %v1114, %v832
        %v1163 = vmul.f32 %v1115, %v817
        %v1164 = vmul.f32 %v1116, %v801
        %v1165 = vmul.f32 %v1117, %v833
        %v1166 = vmul.f32 %v1118, %v818
        %v1167 = vmul.f32 %v1119, %v802
        %v1168 = vmul.f32 %v1120, %v834
        %v1169 = vmul.f32 %v1121, %v819
        %v1170 = vmul.f32 %v1122, %v803
        %v1171 = vmul.f32 %v1123, %v835
        %v1172 = vmul.f32 %v1124, %v820
        %v1173 = vmul.f32 %v1125, %v804
        %v1174 = vmul.f32 %v1126, %v836
        %v1175 = vmul.f32 %v1127, %v821
        %v1176 = vmul.f32 %v1128, %v805
        %v1177 = vmul.f32 %v1129, %v837
        %v1178 = vmul.f32 %v1130, %v822
        %v1179 = vmul.f32 %v1131, %v806
        %v1180 = vmul.f32 %v1132, %v838
        %v1181 = vmul.f32 %v1133, %v823
        %v1182 = vmul.f32 %v1134, %v807
        %v1183 = vmul.f32 %v1135, %v839
        %v1184 = vmul.f32 %v1136, %v824
        %v1185 = vmul.f32 %v1137, %v808
        %v1186 = vmul.f32 %v1138, %v840
        %v1187 = vmul.f32 %v1139, %v825
        %v1188 = vmul.f32 %v1140, %v809
        %v1189 = vmul.f32 %v1141, %v841
        %v1190 = vmul.f32 %v1142, %v826
        %v1191 = vmul.f32 %v1143, %v810
        %v1192 = vmul.f32 %v1144, %v842
        %v1193 = vmul.f32 %v1145, %v827
        %v1194 = vmul.f32 %v1146, %v811
        %v1195 = vmul.f32 %v1147, %v843
        %v1196 = vadd.f32 %v972, %v1148
        %v1197 = vadd.f32 %v973, %v1149
        %v1198 = vadd.f32 %v974, %v1150
        %v1199 = vadd.f32 %v975, %v1151
        %v1200 = vadd.f32 %v976, %v1152
        %v1201 = vadd.f32 %v977, %v1153
        %v1202 = vadd.f32 %v978, %v1154
        %v1203 = vadd.f32 %v979, %v1155
        %v1204 = vadd.f32 %v980, %v1156
        %v1205 = vadd.f32 %v981, %v1157
        %v1206 = vadd.f32 %v982, %v1158
        %v1207 = vadd.f32 %v983, %v1159
        %v1208 = vadd.f32 %v984, %v1160
        %v1209 = vadd.f32 %v985, %v1161
        %v1210 = vadd.f32 %v986, %v1162
        %v1211 = vadd.f32 %v987, %v1163
        %v1212 = vadd.f32 %v988, %v1164
        %v1213 = vadd.f32 %v989, %v1165
        %v1214 = vadd.f32 %v990, %v1166
        %v1215 = vadd.f32 %v991, %v1167
        %v1216 = vadd.f32 %v992, %v1168
        %v1217 = vadd.f32 %v993, %v1169
        %v1218 = vadd.f32 %v994, %v1170
        %v1219 = vadd.f32 %v995, %v1171
        %v1220 = vadd.f32 %v996, %v1172
        %v1221 = vadd.f32 %v997, %v1173
        %v1222 = vadd.f32 %v998, %v1174
        %v1223 = vadd.f32 %v999, %v1175
        %v1224 = vadd.f32 %v1000, %v1176
        %v1225 = vadd.f32 %v1001, %v1177
        %v1226 = vadd.f32 %v1002, %v1178
        %v1227 = vadd.f32 %v1003, %v1179
        %v1228 = vadd.f32 %v1004, %v1180
        %v1229 = vadd.f32 %v1005, %v1181
        %v1230 = vadd.f32 %v1006, %v1182
        %v1231 = vadd.f32 %v1007, %v1183
        %v1232 = vadd.f32 %v1008, %v1184
        %v1233 = vadd.f32 %v1009, %v1185
        %v1234 = vadd.f32 %v1010, %v1186
        %v1235 = vadd.f32 %v1011, %v1187
        %v1236 = vadd.f32 %v1012, %v1188
        %v1237 = vadd.f32 %v1013, %v1189
        %v1238 = vadd.f32 %v1014, %v1190
        %v1239 = vadd.f32 %v1015, %v1191
        %v1240 = vadd.f32 %v1016, %v1192
        %v1241 = vadd.f32 %v1017, %v1193
        %v1242 = vadd.f32 %v1018, %v1194
        %v1243 = vadd.f32 %v1019, %v1195
        %s1244 = scalar_lea.vmem [#allocation2], 6
        %v1245 = vld [vmem:[%s1244] ss:$8 sm:$0x7]
        %s1246 = scalar_lea.vmem [#allocation2], 7
        %v1247 = vld [vmem:[%s1246] ss:$8 sm:$0x7]
        %s1248 = scalar_lea.vmem [#allocation2], 24
        %v1249 = vld [vmem:[%s1248] ss:$8 sm:$0x7]
        %s1250 = scalar_lea.vmem [#allocation2], 25
        %v1251 = vld [vmem:[%s1250] ss:$8 sm:$0x7]
        %1252 = vrot.lane.b32.xlu0 %v1196, 96
        %v1253 = vpop.permute.xlu0 %1252
        %1254 = vrot.lane.b32.xlu0 %v1199, 96
        %v1255 = vpop.permute.xlu0 %1254
        %1256 = vrot.lane.b32.xlu0 %v1202, 96
        %v1257 = vpop.permute.xlu0 %1256
        %1258 = vrot.lane.b32.xlu0 %v1205, 96
        %v1259 = vpop.permute.xlu0 %1258
        %1260 = vrot.lane.b32.xlu0 %v1208, 96
        %v1261 = vpop.permute.xlu0 %1260
        %1262 = vrot.lane.b32.xlu0 %v1211, 96
        %v1263 = vpop.permute.xlu0 %1262
        %1264 = vrot.lane.b32.xlu0 %v1214, 96
        %v1265 = vpop.permute.xlu0 %1264
        %1266 = vrot.lane.b32.xlu0 %v1217, 96
        %v1267 = vpop.permute.xlu0 %1266
        %1268 = vrot.lane.b32.xlu0 %v1220, 96
        %v1269 = vpop.permute.xlu0 %1268
        %1270 = vrot.lane.b32.xlu0 %v1223, 96
        %v1271 = vpop.permute.xlu0 %1270
        %1272 = vrot.lane.b32.xlu0 %v1226, 96
        %v1273 = vpop.permute.xlu0 %1272
        %1274 = vrot.lane.b32.xlu0 %v1229, 96
        %v1275 = vpop.permute.xlu0 %1274
        %1276 = vrot.lane.b32.xlu0 %v1232, 96
        %v1277 = vpop.permute.xlu0 %1276
        %1278 = vrot.lane.b32.xlu0 %v1235, 96
        %v1279 = vpop.permute.xlu0 %1278
        %1280 = vrot.lane.b32.xlu0 %v1238, 96
        %v1281 = vpop.permute.xlu0 %1280
        %1282 = vrot.lane.b32.xlu0 %v1241, 96
        %v1283 = vpop.permute.xlu0 %1282
        %1284 = vrot.lane.b32.xlu0 %v1197, 96
        %v1285 = vpop.permute.xlu0 %1284
        %1286 = vrot.lane.b32.xlu0 %v1200, 96
        %v1287 = vpop.permute.xlu0 %1286
        %1288 = vrot.lane.b32.xlu0 %v1203, 96
        %v1289 = vpop.permute.xlu0 %1288
        %1290 = vrot.lane.b32.xlu0 %v1206, 96
        %v1291 = vpop.permute.xlu0 %1290
        %1292 = vrot.lane.b32.xlu0 %v1209, 96
        %v1293 = vpop.permute.xlu0 %1292
        %1294 = vrot.lane.b32.xlu0 %v1212, 96
        %v1295 = vpop.permute.xlu0 %1294
        %1296 = vrot.lane.b32.xlu0 %v1215, 96
        %v1297 = vpop.permute.xlu0 %1296
        %1298 = vrot.lane.b32.xlu0 %v1218, 96
        %v1299 = vpop.permute.xlu0 %1298
        %1300 = vrot.lane.b32.xlu0 %v1221, 96
        %v1301 = vpop.permute.xlu0 %1300
        %1302 = vrot.lane.b32.xlu0 %v1224, 96
        %v1303 = vpop.permute.xlu0 %1302
        %1304 = vrot.lane.b32.xlu0 %v1227, 96
        %v1305 = vpop.permute.xlu0 %1304
        %1306 = vrot.lane.b32.xlu0 %v1230, 96
        %v1307 = vpop.permute.xlu0 %1306
        %1308 = vrot.lane.b32.xlu0 %v1233, 96
        %v1309 = vpop.permute.xlu0 %1308
        %1310 = vrot.lane.b32.xlu0 %v1236, 96
        %v1311 = vpop.permute.xlu0 %1310
        %1312 = vrot.lane.b32.xlu0 %v1239, 96
        %v1313 = vpop.permute.xlu0 %1312
        %1314 = vrot.lane.b32.xlu0 %v1242, 96
        %v1315 = vpop.permute.xlu0 %1314
        %1316 = vrot.lane.b32.xlu0 %v1198, 96
        %v1317 = vpop.permute.xlu0 %1316
        %1318 = vrot.lane.b32.xlu0 %v1201, 96
        %v1319 = vpop.permute.xlu0 %1318
        %1320 = vrot.lane.b32.xlu0 %v1204, 96
        %v1321 = vpop.permute.xlu0 %1320
        %1322 = vrot.lane.b32.xlu0 %v1207, 96
        %v1323 = vpop.permute.xlu0 %1322
        %1324 = vrot.lane.b32.xlu0 %v1210, 96
        %v1325 = vpop.permute.xlu0 %1324
        %1326 = vrot.lane.b32.xlu0 %v1213, 96
        %v1327 = vpop.permute.xlu0 %1326
        %1328 = vrot.lane.b32.xlu0 %v1216, 96
        %v1329 = vpop.permute.xlu0 %1328
        %1330 = vrot.lane.b32.xlu0 %v1219, 96
        %v1331 = vpop.permute.xlu0 %1330
        %1332 = vrot.lane.b32.xlu0 %v1222, 96
        %v1333 = vpop.permute.xlu0 %1332
        %1334 = vrot.lane.b32.xlu0 %v1225, 96
        %v1335 = vpop.permute.xlu0 %1334
        %1336 = vrot.lane.b32.xlu0 %v1228, 96
        %v1337 = vpop.permute.xlu0 %1336
        %1338 = vrot.lane.b32.xlu0 %v1231, 96
        %v1339 = vpop.permute.xlu0 %1338
        %1340 = vrot.lane.b32.xlu0 %v1234, 96
        %v1341 = vpop.permute.xlu0 %1340
        %1342 = vrot.lane.b32.xlu0 %v1237, 96
        %v1343 = vpop.permute.xlu0 %1342
        %1344 = vrot.lane.b32.xlu0 %v1240, 96
        %v1345 = vpop.permute.xlu0 %1344
        %1346 = vrot.lane.b32.xlu0 %v1243, 96
        %v1347 = vpop.permute.xlu0 %1346
        %v1348 = vsel %vm795, %v1285, %v1317
        %v1349 = vsel %vm795, %v1287, %v1319
        %v1350 = vsel %vm795, %v1289, %v1321
        %v1351 = vsel %vm795, %v1291, %v1323
        %v1352 = vsel %vm795, %v1293, %v1325
        %v1353 = vsel %vm795, %v1295, %v1327
        %v1354 = vsel %vm795, %v1297, %v1329
        %v1355 = vsel %vm795, %v1299, %v1331
        %v1356 = vsel %vm795, %v1301, %v1333
        %v1357 = vsel %vm795, %v1303, %v1335
        %v1358 = vsel %vm795, %v1305, %v1337
        %v1359 = vsel %vm795, %v1307, %v1339
        %v1360 = vsel %vm795, %v1309, %v1341
        %v1361 = vsel %vm795, %v1311, %v1343
        %v1362 = vsel %vm795, %v1313, %v1345
        %v1363 = vsel %vm795, %v1315, %v1347
        %v1364 = vsel %vm795, %v1253, %v1285
        %v1365 = vsel %vm795, %v1255, %v1287
        %v1366 = vsel %vm795, %v1257, %v1289
        %v1367 = vsel %vm795, %v1259, %v1291
        %v1368 = vsel %vm795, %v1261, %v1293
        %v1369 = vsel %vm795, %v1263, %v1295
        %v1370 = vsel %vm795, %v1265, %v1297
        %v1371 = vsel %vm795, %v1267, %v1299
        %v1372 = vsel %vm795, %v1269, %v1301
        %v1373 = vsel %vm795, %v1271, %v1303
        %v1374 = vsel %vm795, %v1273, %v1305
        %v1375 = vsel %vm795, %v1275, %v1307
        %v1376 = vsel %vm795, %v1277, %v1309
        %v1377 = vsel %vm795, %v1279, %v1311
        %v1378 = vsel %vm795, %v1281, %v1313
        %v1379 = vsel %vm795, %v1283, %v1315
        %v1380 = vsel %vm795, %v1317, %v1253
        %v1381 = vsel %vm795, %v1319, %v1255
        %v1382 = vsel %vm795, %v1321, %v1257
        %v1383 = vsel %vm795, %v1323, %v1259
        %v1384 = vsel %vm795, %v1325, %v1261
        %v1385 = vsel %vm795, %v1327, %v1263
        %v1386 = vsel %vm795, %v1329, %v1265
        %v1387 = vsel %vm795, %v1331, %v1267
        %v1388 = vsel %vm795, %v1333, %v1269
        %v1389 = vsel %vm795, %v1335, %v1271
        %v1390 = vsel %vm795, %v1337, %v1273
        %v1391 = vsel %vm795, %v1339, %v1275
        %v1392 = vsel %vm795, %v1341, %v1277
        %v1393 = vsel %vm795, %v1343, %v1279
        %v1394 = vsel %vm795, %v1345, %v1281
        %v1395 = vsel %vm795, %v1347, %v1283
        %v1397 = vlaneseq
        %v1398 = vshrl.u32 %v1397, 7
        %v1399 = vsub.s32 0, %v1398
        %v1400 = vrot.slane %v1245, %v1399
        %v1401 = vlaneseq
        %v1402 = vshrl.u32 %v1401, 7
        %v1403 = vsub.s32 1, %v1402
        %v1404 = vrot.slane %v1245, %v1403
        %v1405 = vlaneseq
        %v1406 = vshrl.u32 %v1405, 7
        %v1407 = vsub.s32 2, %v1406
        %v1408 = vrot.slane %v1245, %v1407
        %v1412 = vsub.f32 %v398, %v1400
        %v1413 = vsub.f32 %v398, %v1404
        %v1414 = vsub.f32 %v398, %v1408
        %v1415 = vsub.f32 %v399, %v1400
        %v1416 = vsub.f32 %v399, %v1404
        %v1417 = vsub.f32 %v399, %v1408
        %v1418 = vsub.f32 %v400, %v1400
        %v1419 = vsub.f32 %v400, %v1404
        %v1420 = vsub.f32 %v400, %v1408
        %v1421 = vsub.f32 %v401, %v1400
        %v1422 = vsub.f32 %v401, %v1404
        %v1423 = vsub.f32 %v401, %v1408
        %v1424 = vsub.f32 %v402, %v1400
        %v1425 = vsub.f32 %v402, %v1404
        %v1426 = vsub.f32 %v402, %v1408
        %v1427 = vsub.f32 %v403, %v1400
        %v1428 = vsub.f32 %v403, %v1404
        %v1429 = vsub.f32 %v403, %v1408
        %v1430 = vsub.f32 %v404, %v1400
        %v1431 = vsub.f32 %v404, %v1404
        %v1432 = vsub.f32 %v404, %v1408
        %v1433 = vsub.f32 %v405, %v1400
        %v1434 = vsub.f32 %v405, %v1404
        %v1435 = vsub.f32 %v405, %v1408
        %v1436 = vsub.f32 %v406, %v1400
        %v1437 = vsub.f32 %v406, %v1404
        %v1438 = vsub.f32 %v406, %v1408
        %v1439 = vsub.f32 %v407, %v1400
        %v1440 = vsub.f32 %v407, %v1404
        %v1441 = vsub.f32 %v407, %v1408
        %v1442 = vsub.f32 %v408, %v1400
        %v1443 = vsub.f32 %v408, %v1404
        %v1444 = vsub.f32 %v408, %v1408
        %v1445 = vsub.f32 %v409, %v1400
        %v1446 = vsub.f32 %v409, %v1404
        %v1447 = vsub.f32 %v409, %v1408
        %v1448 = vsub.f32 %v410, %v1400
        %v1449 = vsub.f32 %v410, %v1404
        %v1450 = vsub.f32 %v410, %v1408
        %v1451 = vsub.f32 %v411, %v1400
        %v1452 = vsub.f32 %v411, %v1404
        %v1453 = vsub.f32 %v411, %v1408
        %v1454 = vsub.f32 %v412, %v1400
        %v1455 = vsub.f32 %v412, %v1404
        %v1456 = vsub.f32 %v412, %v1408
        %v1457 = vsub.f32 %v413, %v1400
        %v1458 = vsub.f32 %v413, %v1404
        %v1459 = vsub.f32 %v413, %v1408
        %v1461 = vlaneseq
        %v1462 = vshrl.u32 %v1461, 7
        %v1463 = vsub.s32 0, %v1462
        %v1464 = vrot.slane %v1247, %v1463
        %v1465 = vlaneseq
        %v1466 = vshrl.u32 %v1465, 7
        %v1467 = vsub.s32 1, %v1466
        %v1468 = vrot.slane %v1247, %v1467
        %v1469 = vlaneseq
        %v1470 = vshrl.u32 %v1469, 7
        %v1471 = vsub.s32 2, %v1470
        %v1472 = vrot.slane %v1247, %v1471
        %v1476 = vmul.f32 %v1412, %v1464
        %v1477 = vmul.f32 %v1413, %v1468
        %v1478 = vmul.f32 %v1414, %v1472
        %v1479 = vmul.f32 %v1415, %v1464
        %v1480 = vmul.f32 %v1416, %v1468
        %v1481 = vmul.f32 %v1417, %v1472
        %v1482 = vmul.f32 %v1418, %v1464
        %v1483 = vmul.f32 %v1419, %v1468
        %v1484 = vmul.f32 %v1420, %v1472
        %v1485 = vmul.f32 %v1421, %v1464
        %v1486 = vmul.f32 %v1422, %v1468
        %v1487 = vmul.f32 %v1423, %v1472
        %v1488 = vmul.f32 %v1424, %v1464
        %v1489 = vmul.f32 %v1425, %v1468
        %v1490 = vmul.f32 %v1426, %v1472
        %v1491 = vmul.f32 %v1427, %v1464
        %v1492 = vmul.f32 %v1428, %v1468
        %v1493 = vmul.f32 %v1429, %v1472
        %v1494 = vmul.f32 %v1430, %v1464
        %v1495 = vmul.f32 %v1431, %v1468
        %v1496 = vmul.f32 %v1432, %v1472
        %v1497 = vmul.f32 %v1433, %v1464
        %v1498 = vmul.f32 %v1434, %v1468
        %v1499 = vmul.f32 %v1435, %v1472
        %v1500 = vmul.f32 %v1436, %v1464
        %v1501 = vmul.f32 %v1437, %v1468
        %v1502 = vmul.f32 %v1438, %v1472
        %v1503 = vmul.f32 %v1439, %v1464
        %v1504 = vmul.f32 %v1440, %v1468
        %v1505 = vmul.f32 %v1441, %v1472
        %v1506 = vmul.f32 %v1442, %v1464
        %v1507 = vmul.f32 %v1443, %v1468
        %v1508 = vmul.f32 %v1444, %v1472
        %v1509 = vmul.f32 %v1445, %v1464
        %v1510 = vmul.f32 %v1446, %v1468
        %v1511 = vmul.f32 %v1447, %v1472
        %v1512 = vmul.f32 %v1448, %v1464
        %v1513 = vmul.f32 %v1449, %v1468
        %v1514 = vmul.f32 %v1450, %v1472
        %v1515 = vmul.f32 %v1451, %v1464
        %v1516 = vmul.f32 %v1452, %v1468
        %v1517 = vmul.f32 %v1453, %v1472
        %v1518 = vmul.f32 %v1454, %v1464
        %v1519 = vmul.f32 %v1455, %v1468
        %v1520 = vmul.f32 %v1456, %v1472
        %v1521 = vmul.f32 %v1457, %v1464
        %v1522 = vmul.f32 %v1458, %v1468
        %v1523 = vmul.f32 %v1459, %v1472
        %v1524 = vmul.f32 %v1476, %v1196
        %v1525 = vmul.f32 %v1477, %v1197
        %v1526 = vmul.f32 %v1478, %v1198
        %v1527 = vmul.f32 %v1479, %v1199
        %v1528 = vmul.f32 %v1480, %v1200
        %v1529 = vmul.f32 %v1481, %v1201
        %v1530 = vmul.f32 %v1482, %v1202
        %v1531 = vmul.f32 %v1483, %v1203
        %v1532 = vmul.f32 %v1484, %v1204
        %v1533 = vmul.f32 %v1485, %v1205
        %v1534 = vmul.f32 %v1486, %v1206
        %v1535 = vmul.f32 %v1487, %v1207
        %v1536 = vmul.f32 %v1488, %v1208
        %v1537 = vmul.f32 %v1489, %v1209
        %v1538 = vmul.f32 %v1490, %v1210
        %v1539 = vmul.f32 %v1491, %v1211
        %v1540 = vmul.f32 %v1492, %v1212
        %v1541 = vmul.f32 %v1493, %v1213
        %v1542 = vmul.f32 %v1494, %v1214
        %v1543 = vmul.f32 %v1495, %v1215
        %v1544 = vmul.f32 %v1496, %v1216
        %v1545 = vmul.f32 %v1497, %v1217
        %v1546 = vmul.f32 %v1498, %v1218
        %v1547 = vmul.f32 %v1499, %v1219
        %v1548 = vmul.f32 %v1500, %v1220
        %v1549 = vmul.f32 %v1501, %v1221
        %v1550 = vmul.f32 %v1502, %v1222
        %v1551 = vmul.f32 %v1503, %v1223
        %v1552 = vmul.f32 %v1504, %v1224
        %v1553 = vmul.f32 %v1505, %v1225
        %v1554 = vmul.f32 %v1506, %v1226
        %v1555 = vmul.f32 %v1507, %v1227
        %v1556 = vmul.f32 %v1508, %v1228
        %v1557 = vmul.f32 %v1509, %v1229
        %v1558 = vmul.f32 %v1510, %v1230
        %v1559 = vmul.f32 %v1511, %v1231
        %v1560 = vmul.f32 %v1512, %v1232
        %v1561 = vmul.f32 %v1513, %v1233
        %v1562 = vmul.f32 %v1514, %v1234
        %v1563 = vmul.f32 %v1515, %v1235
        %v1564 = vmul.f32 %v1516, %v1236
        %v1565 = vmul.f32 %v1517, %v1237
        %v1566 = vmul.f32 %v1518, %v1238
        %v1567 = vmul.f32 %v1519, %v1239
        %v1568 = vmul.f32 %v1520, %v1240
        %v1569 = vmul.f32 %v1521, %v1241
        %v1570 = vmul.f32 %v1522, %v1242
        %v1571 = vmul.f32 %v1523, %v1243
        %v1573 = vlaneseq
        %v1574 = vshrl.u32 %v1573, 7
        %v1575 = vsub.s32 0, %v1574
        %v1576 = vrot.slane %v1249, %v1575
        %v1577 = vlaneseq
        %v1578 = vshrl.u32 %v1577, 7
        %v1579 = vsub.s32 1, %v1578
        %v1580 = vrot.slane %v1249, %v1579
        %v1581 = vlaneseq
        %v1582 = vshrl.u32 %v1581, 7
        %v1583 = vsub.s32 2, %v1582
        %v1584 = vrot.slane %v1249, %v1583
        %v1588 = vsub.f32 %v1576, %v398
        %v1589 = vsub.f32 %v1580, %v398
        %v1590 = vsub.f32 %v1584, %v398
        %v1591 = vsub.f32 %v1576, %v399
        %v1592 = vsub.f32 %v1580, %v399
        %v1593 = vsub.f32 %v1584, %v399
        %v1594 = vsub.f32 %v1576, %v400
        %v1595 = vsub.f32 %v1580, %v400
        %v1596 = vsub.f32 %v1584, %v400
        %v1597 = vsub.f32 %v1576, %v401
        %v1598 = vsub.f32 %v1580, %v401
        %v1599 = vsub.f32 %v1584, %v401
        %v1600 = vsub.f32 %v1576, %v402
        %v1601 = vsub.f32 %v1580, %v402
        %v1602 = vsub.f32 %v1584, %v402
        %v1603 = vsub.f32 %v1576, %v403
        %v1604 = vsub.f32 %v1580, %v403
        %v1605 = vsub.f32 %v1584, %v403
        %v1606 = vsub.f32 %v1576, %v404
        %v1607 = vsub.f32 %v1580, %v404
        %v1608 = vsub.f32 %v1584, %v404
        %v1609 = vsub.f32 %v1576, %v405
        %v1610 = vsub.f32 %v1580, %v405
        %v1611 = vsub.f32 %v1584, %v405
        %v1612 = vsub.f32 %v1576, %v406
        %v1613 = vsub.f32 %v1580, %v406
        %v1614 = vsub.f32 %v1584, %v406
        %v1615 = vsub.f32 %v1576, %v407
        %v1616 = vsub.f32 %v1580, %v407
        %v1617 = vsub.f32 %v1584, %v407
        %v1618 = vsub.f32 %v1576, %v408
        %v1619 = vsub.f32 %v1580, %v408
        %v1620 = vsub.f32 %v1584, %v408
        %v1621 = vsub.f32 %v1576, %v409
        %v1622 = vsub.f32 %v1580, %v409
        %v1623 = vsub.f32 %v1584, %v409
        %v1624 = vsub.f32 %v1576, %v410
        %v1625 = vsub.f32 %v1580, %v410
        %v1626 = vsub.f32 %v1584, %v410
        %v1627 = vsub.f32 %v1576, %v411
        %v1628 = vsub.f32 %v1580, %v411
        %v1629 = vsub.f32 %v1584, %v411
        %v1630 = vsub.f32 %v1576, %v412
        %v1631 = vsub.f32 %v1580, %v412
        %v1632 = vsub.f32 %v1584, %v412
        %v1633 = vsub.f32 %v1576, %v413
        %v1634 = vsub.f32 %v1580, %v413
        %v1635 = vsub.f32 %v1584, %v413
        %v1637 = vlaneseq
        %v1638 = vshrl.u32 %v1637, 7
        %v1639 = vsub.s32 0, %v1638
        %v1640 = vrot.slane %v1251, %v1639
        %v1641 = vlaneseq
        %v1642 = vshrl.u32 %v1641, 7
        %v1643 = vsub.s32 1, %v1642
        %v1644 = vrot.slane %v1251, %v1643
        %v1645 = vlaneseq
        %v1646 = vshrl.u32 %v1645, 7
        %v1647 = vsub.s32 2, %v1646
        %v1648 = vrot.slane %v1251, %v1647
        %v1652 = vmul.f32 %v1588, %v1640
        %v1653 = vmul.f32 %v1589, %v1644
        %v1654 = vmul.f32 %v1590, %v1648
        %v1655 = vmul.f32 %v1591, %v1640
        %v1656 = vmul.f32 %v1592, %v1644
        %v1657 = vmul.f32 %v1593, %v1648
        %v1658 = vmul.f32 %v1594, %v1640
        %v1659 = vmul.f32 %v1595, %v1644
        %v1660 = vmul.f32 %v1596, %v1648
        %v1661 = vmul.f32 %v1597, %v1640
        %v1662 = vmul.f32 %v1598, %v1644
        %v1663 = vmul.f32 %v1599, %v1648
        %v1664 = vmul.f32 %v1600, %v1640
        %v1665 = vmul.f32 %v1601, %v1644
        %v1666 = vmul.f32 %v1602, %v1648
        %v1667 = vmul.f32 %v1603, %v1640
        %v1668 = vmul.f32 %v1604, %v1644
        %v1669 = vmul.f32 %v1605, %v1648
        %v1670 = vmul.f32 %v1606, %v1640
        %v1671 = vmul.f32 %v1607, %v1644
        %v1672 = vmul.f32 %v1608, %v1648
        %v1673 = vmul.f32 %v1609, %v1640
        %v1674 = vmul.f32 %v1610, %v1644
        %v1675 = vmul.f32 %v1611, %v1648
        %v1676 = vmul.f32 %v1612, %v1640
        %v1677 = vmul.f32 %v1613, %v1644
        %v1678 = vmul.f32 %v1614, %v1648
        %v1679 = vmul.f32 %v1615, %v1640
        %v1680 = vmul.f32 %v1616, %v1644
        %v1681 = vmul.f32 %v1617, %v1648
        %v1682 = vmul.f32 %v1618, %v1640
        %v1683 = vmul.f32 %v1619, %v1644
        %v1684 = vmul.f32 %v1620, %v1648
        %v1685 = vmul.f32 %v1621, %v1640
        %v1686 = vmul.f32 %v1622, %v1644
        %v1687 = vmul.f32 %v1623, %v1648
        %v1688 = vmul.f32 %v1624, %v1640
        %v1689 = vmul.f32 %v1625, %v1644
        %v1690 = vmul.f32 %v1626, %v1648
        %v1691 = vmul.f32 %v1627, %v1640
        %v1692 = vmul.f32 %v1628, %v1644
        %v1693 = vmul.f32 %v1629, %v1648
        %v1694 = vmul.f32 %v1630, %v1640
        %v1695 = vmul.f32 %v1631, %v1644
        %v1696 = vmul.f32 %v1632, %v1648
        %v1697 = vmul.f32 %v1633, %v1640
        %v1698 = vmul.f32 %v1634, %v1644
        %v1699 = vmul.f32 %v1635, %v1648
        %v1700 = vmul.f32 %v1652, %v1364
        %v1701 = vmul.f32 %v1653, %v1348
        %v1702 = vmul.f32 %v1654, %v1380
        %v1703 = vmul.f32 %v1655, %v1365
        %v1704 = vmul.f32 %v1656, %v1349
        %v1705 = vmul.f32 %v1657, %v1381
        %v1706 = vmul.f32 %v1658, %v1366
        %v1707 = vmul.f32 %v1659, %v1350
        %v1708 = vmul.f32 %v1660, %v1382
        %v1709 = vmul.f32 %v1661, %v1367
        %v1710 = vmul.f32 %v1662, %v1351
        %v1711 = vmul.f32 %v1663, %v1383
        %v1712 = vmul.f32 %v1664, %v1368
        %v1713 = vmul.f32 %v1665, %v1352
        %v1714 = vmul.f32 %v1666, %v1384
        %v1715 = vmul.f32 %v1667, %v1369
        %v1716 = vmul.f32 %v1668, %v1353
        %v1717 = vmul.f32 %v1669, %v1385
        %v1718 = vmul.f32 %v1670, %v1370
        %v1719 = vmul.f32 %v1671, %v1354
        %v1720 = vmul.f32 %v1672, %v1386
        %v1721 = vmul.f32 %v1673, %v1371
        %v1722 = vmul.f32 %v1674, %v1355
        %v1723 = vmul.f32 %v1675, %v1387
        %v1724 = vmul.f32 %v1676, %v1372
        %v1725 = vmul.f32 %v1677, %v1356
        %v1726 = vmul.f32 %v1678, %v1388
        %v1727 = vmul.f32 %v1679, %v1373
        %v1728 = vmul.f32 %v1680, %v1357
        %v1729 = vmul.f32 %v1681, %v1389
        %v1730 = vmul.f32 %v1682, %v1374
        %v1731 = vmul.f32 %v1683, %v1358
        %v1732 = vmul.f32 %v1684, %v1390
        %v1733 = vmul.f32 %v1685, %v1375
        %v1734 = vmul.f32 %v1686, %v1359
        %v1735 = vmul.f32 %v1687, %v1391
        %v1736 = vmul.f32 %v1688, %v1376
        %v1737 = vmul.f32 %v1689, %v1360
        %v1738 = vmul.f32 %v1690, %v1392
        %v1739 = vmul.f32 %v1691, %v1377
        %v1740 = vmul.f32 %v1692, %v1361
        %v1741 = vmul.f32 %v1693, %v1393
        %v1742 = vmul.f32 %v1694, %v1378
        %v1743 = vmul.f32 %v1695, %v1362
        %v1744 = vmul.f32 %v1696, %v1394
        %v1745 = vmul.f32 %v1697, %v1379
        %v1746 = vmul.f32 %v1698, %v1363
        %v1747 = vmul.f32 %v1699, %v1395
        %v1748 = vadd.f32 %v1524, %v1700
        %v1749 = vadd.f32 %v1525, %v1701
        %v1750 = vadd.f32 %v1526, %v1702
        %v1751 = vadd.f32 %v1527, %v1703
        %v1752 = vadd.f32 %v1528, %v1704
        %v1753 = vadd.f32 %v1529, %v1705
        %v1754 = vadd.f32 %v1530, %v1706
        %v1755 = vadd.f32 %v1531, %v1707
        %v1756 = vadd.f32 %v1532, %v1708
        %v1757 = vadd.f32 %v1533, %v1709
        %v1758 = vadd.f32 %v1534, %v1710
        %v1759 = vadd.f32 %v1535, %v1711
        %v1760 = vadd.f32 %v1536, %v1712
        %v1761 = vadd.f32 %v1537, %v1713
        %v1762 = vadd.f32 %v1538, %v1714
        %v1763 = vadd.f32 %v1539, %v1715
        %v1764 = vadd.f32 %v1540, %v1716
        %v1765 = vadd.f32 %v1541, %v1717
        %v1766 = vadd.f32 %v1542, %v1718
        %v1767 = vadd.f32 %v1543, %v1719
        %v1768 = vadd.f32 %v1544, %v1720
        %v1769 = vadd.f32 %v1545, %v1721
        %v1770 = vadd.f32 %v1546, %v1722
        %v1771 = vadd.f32 %v1547, %v1723
        %v1772 = vadd.f32 %v1548, %v1724
        %v1773 = vadd.f32 %v1549, %v1725
        %v1774 = vadd.f32 %v1550, %v1726
        %v1775 = vadd.f32 %v1551, %v1727
        %v1776 = vadd.f32 %v1552, %v1728
        %v1777 = vadd.f32 %v1553, %v1729
        %v1778 = vadd.f32 %v1554, %v1730
        %v1779 = vadd.f32 %v1555, %v1731
        %v1780 = vadd.f32 %v1556, %v1732
        %v1781 = vadd.f32 %v1557, %v1733
        %v1782 = vadd.f32 %v1558, %v1734
        %v1783 = vadd.f32 %v1559, %v1735
        %v1784 = vadd.f32 %v1560, %v1736
        %v1785 = vadd.f32 %v1561, %v1737
        %v1786 = vadd.f32 %v1562, %v1738
        %v1787 = vadd.f32 %v1563, %v1739
        %v1788 = vadd.f32 %v1564, %v1740
        %v1789 = vadd.f32 %v1565, %v1741
        %v1790 = vadd.f32 %v1566, %v1742
        %v1791 = vadd.f32 %v1567, %v1743
        %v1792 = vadd.f32 %v1568, %v1744
        %v1793 = vadd.f32 %v1569, %v1745
        %v1794 = vadd.f32 %v1570, %v1746
        %v1795 = vadd.f32 %v1571, %v1747
        %s1796 = scalar_lea.vmem [#allocation2], 26
        %v1797 = vld [vmem:[%s1796] ss:$8 sm:$0x7]
        %s1798 = scalar_lea.vmem [#allocation2], 27
        %v1799 = vld [vmem:[%s1798] ss:$8 sm:$0x7]
        %s1800 = scalar_lea.vmem [#allocation2], 28
        %v1801 = vld [vmem:[%s1800] ss:$8 sm:$0x7]
        %s1802 = scalar_lea.vmem [#allocation2], 29
        %v1803 = vld [vmem:[%s1802] ss:$8 sm:$0x7]
        %1804 = vrot.lane.b32.xlu0 %v1748, 96
        %v1805 = vpop.permute.xlu0 %1804
        %1806 = vrot.lane.b32.xlu0 %v1751, 96
        %v1807 = vpop.permute.xlu0 %1806
        %1808 = vrot.lane.b32.xlu0 %v1754, 96
        %v1809 = vpop.permute.xlu0 %1808
        %1810 = vrot.lane.b32.xlu0 %v1757, 96
        %v1811 = vpop.permute.xlu0 %1810
        %1812 = vrot.lane.b32.xlu0 %v1760, 96
        %v1813 = vpop.permute.xlu0 %1812
        %1814 = vrot.lane.b32.xlu0 %v1763, 96
        %v1815 = vpop.permute.xlu0 %1814
        %1816 = vrot.lane.b32.xlu0 %v1766, 96
        %v1817 = vpop.permute.xlu0 %1816
        %1818 = vrot.lane.b32.xlu0 %v1769, 96
        %v1819 = vpop.permute.xlu0 %1818
        %1820 = vrot.lane.b32.xlu0 %v1772, 96
        %v1821 = vpop.permute.xlu0 %1820
        %1822 = vrot.lane.b32.xlu0 %v1775, 96
        %v1823 = vpop.permute.xlu0 %1822
        %1824 = vrot.lane.b32.xlu0 %v1778, 96
        %v1825 = vpop.permute.xlu0 %1824
        %1826 = vrot.lane.b32.xlu0 %v1781, 96
        %v1827 = vpop.permute.xlu0 %1826
        %1828 = vrot.lane.b32.xlu0 %v1784, 96
        %v1829 = vpop.permute.xlu0 %1828
        %1830 = vrot.lane.b32.xlu0 %v1787, 96
        %v1831 = vpop.permute.xlu0 %1830
        %1832 = vrot.lane.b32.xlu0 %v1790, 96
        %v1833 = vpop.permute.xlu0 %1832
        %1834 = vrot.lane.b32.xlu0 %v1793, 96
        %v1835 = vpop.permute.xlu0 %1834
        %1836 = vrot.lane.b32.xlu0 %v1749, 96
        %v1837 = vpop.permute.xlu0 %1836
        %1838 = vrot.lane.b32.xlu0 %v1752, 96
        %v1839 = vpop.permute.xlu0 %1838
        %1840 = vrot.lane.b32.xlu0 %v1755, 96
        %v1841 = vpop.permute.xlu0 %1840
        %1842 = vrot.lane.b32.xlu0 %v1758, 96
        %v1843 = vpop.permute.xlu0 %1842
        %1844 = vrot.lane.b32.xlu0 %v1761, 96
        %v1845 = vpop.permute.xlu0 %1844
        %1846 = vrot.lane.b32.xlu0 %v1764, 96
        %v1847 = vpop.permute.xlu0 %1846
        %1848 = vrot.lane.b32.xlu0 %v1767, 96
        %v1849 = vpop.permute.xlu0 %1848
        %1850 = vrot.lane.b32.xlu0 %v1770, 96
        %v1851 = vpop.permute.xlu0 %1850
        %1852 = vrot.lane.b32.xlu0 %v1773, 96
        %v1853 = vpop.permute.xlu0 %1852
        %1854 = vrot.lane.b32.xlu0 %v1776, 96
        %v1855 = vpop.permute.xlu0 %1854
        %1856 = vrot.lane.b32.xlu0 %v1779, 96
        %v1857 = vpop.permute.xlu0 %1856
        %1858 = vrot.lane.b32.xlu0 %v1782, 96
        %v1859 = vpop.permute.xlu0 %1858
        %1860 = vrot.lane.b32.xlu0 %v1785, 96
        %v1861 = vpop.permute.xlu0 %1860
        %1862 = vrot.lane.b32.xlu0 %v1788, 96
        %v1863 = vpop.permute.xlu0 %1862
        %1864 = vrot.lane.b32.xlu0 %v1791, 96
        %v1865 = vpop.permute.xlu0 %1864
        %1866 = vrot.lane.b32.xlu0 %v1794, 96
        %v1867 = vpop.permute.xlu0 %1866
        %1868 = vrot.lane.b32.xlu0 %v1750, 96
        %v1869 = vpop.permute.xlu0 %1868
        %1870 = vrot.lane.b32.xlu0 %v1753, 96
        %v1871 = vpop.permute.xlu0 %1870
        %1872 = vrot.lane.b32.xlu0 %v1756, 96
        %v1873 = vpop.permute.xlu0 %1872
        %1874 = vrot.lane.b32.xlu0 %v1759, 96
        %v1875 = vpop.permute.xlu0 %1874
        %1876 = vrot.lane.b32.xlu0 %v1762, 96
        %v1877 = vpop.permute.xlu0 %1876
        %1878 = vrot.lane.b32.xlu0 %v1765, 96
        %v1879 = vpop.permute.xlu0 %1878
        %1880 = vrot.lane.b32.xlu0 %v1768, 96
        %v1881 = vpop.permute.xlu0 %1880
        %1882 = vrot.lane.b32.xlu0 %v1771, 96
        %v1883 = vpop.permute.xlu0 %1882
        %1884 = vrot.lane.b32.xlu0 %v1774, 96
        %v1885 = vpop.permute.xlu0 %1884
        %1886 = vrot.lane.b32.xlu0 %v1777, 96
        %v1887 = vpop.permute.xlu0 %1886
        %1888 = vrot.lane.b32.xlu0 %v1780, 96
        %v1889 = vpop.permute.xlu0 %1888
        %1890 = vrot.lane.b32.xlu0 %v1783, 96
        %v1891 = vpop.permute.xlu0 %1890
        %1892 = vrot.lane.b32.xlu0 %v1786, 96
        %v1893 = vpop.permute.xlu0 %1892
        %1894 = vrot.lane.b32.xlu0 %v1789, 96
        %v1895 = vpop.permute.xlu0 %1894
        %1896 = vrot.lane.b32.xlu0 %v1792, 96
        %v1897 = vpop.permute.xlu0 %1896
        %1898 = vrot.lane.b32.xlu0 %v1795, 96
        %v1899 = vpop.permute.xlu0 %1898
        %v1900 = vsel %vm795, %v1837, %v1869
        %v1901 = vsel %vm795, %v1839, %v1871
        %v1902 = vsel %vm795, %v1841, %v1873
        %v1903 = vsel %vm795, %v1843, %v1875
        %v1904 = vsel %vm795, %v1845, %v1877
        %v1905 = vsel %vm795, %v1847, %v1879
        %v1906 = vsel %vm795, %v1849, %v1881
        %v1907 = vsel %vm795, %v1851, %v1883
        %v1908 = vsel %vm795, %v1853, %v1885
        %v1909 = vsel %vm795, %v1855, %v1887
        %v1910 = vsel %vm795, %v1857, %v1889
        %v1911 = vsel %vm795, %v1859, %v1891
        %v1912 = vsel %vm795, %v1861, %v1893
        %v1913 = vsel %vm795, %v1863, %v1895
        %v1914 = vsel %vm795, %v1865, %v1897
        %v1915 = vsel %vm795, %v1867, %v1899
        %v1916 = vsel %vm795, %v1805, %v1837
        %v1917 = vsel %vm795, %v1807, %v1839
        %v1918 = vsel %vm795, %v1809, %v1841
        %v1919 = vsel %vm795, %v1811, %v1843
        %v1920 = vsel %vm795, %v1813, %v1845
        %v1921 = vsel %vm795, %v1815, %v1847
        %v1922 = vsel %vm795, %v1817, %v1849
        %v1923 = vsel %vm795, %v1819, %v1851
        %v1924 = vsel %vm795, %v1821, %v1853
        %v1925 = vsel %vm795, %v1823, %v1855
        %v1926 = vsel %vm795, %v1825, %v1857
        %v1927 = vsel %vm795, %v1827, %v1859
        %v1928 = vsel %vm795, %v1829, %v1861
        %v1929 = vsel %vm795, %v1831, %v1863
        %v1930 = vsel %vm795, %v1833, %v1865
        %v1931 = vsel %vm795, %v1835, %v1867
        %v1933 = vlaneseq
        %v1934 = vshrl.u32 %v1933, 7
        %v1935 = vsub.s32 0, %v1934
        %v1936 = vrot.slane %v1797, %v1935
        %v1937 = vlaneseq
        %v1938 = vshrl.u32 %v1937, 7
        %v1939 = vsub.s32 1, %v1938
        %v1940 = vrot.slane %v1797, %v1939
        %v1943 = vsub.f32 %v398, %v1936
        %v1944 = vsub.f32 %v398, %v1940
        %v1945 = vsub.f32 %v399, %v1936
        %v1946 = vsub.f32 %v399, %v1940
        %v1947 = vsub.f32 %v400, %v1936
        %v1948 = vsub.f32 %v400, %v1940
        %v1949 = vsub.f32 %v401, %v1936
        %v1950 = vsub.f32 %v401, %v1940
        %v1951 = vsub.f32 %v402, %v1936
        %v1952 = vsub.f32 %v402, %v1940
        %v1953 = vsub.f32 %v403, %v1936
        %v1954 = vsub.f32 %v403, %v1940
        %v1955 = vsub.f32 %v404, %v1936
        %v1956 = vsub.f32 %v404, %v1940
        %v1957 = vsub.f32 %v405, %v1936
        %v1958 = vsub.f32 %v405, %v1940
        %v1959 = vsub.f32 %v406, %v1936
        %v1960 = vsub.f32 %v406, %v1940
        %v1961 = vsub.f32 %v407, %v1936
        %v1962 = vsub.f32 %v407, %v1940
        %v1963 = vsub.f32 %v408, %v1936
        %v1964 = vsub.f32 %v408, %v1940
        %v1965 = vsub.f32 %v409, %v1936
        %v1966 = vsub.f32 %v409, %v1940
        %v1967 = vsub.f32 %v410, %v1936
        %v1968 = vsub.f32 %v410, %v1940
        %v1969 = vsub.f32 %v411, %v1936
        %v1970 = vsub.f32 %v411, %v1940
        %v1971 = vsub.f32 %v412, %v1936
        %v1972 = vsub.f32 %v412, %v1940
        %v1973 = vsub.f32 %v413, %v1936
        %v1974 = vsub.f32 %v413, %v1940
        %v1976 = vlaneseq
        %v1977 = vshrl.u32 %v1976, 7
        %v1978 = vsub.s32 0, %v1977
        %v1979 = vrot.slane %v1799, %v1978
        %v1980 = vlaneseq
        %v1981 = vshrl.u32 %v1980, 7
        %v1982 = vsub.s32 1, %v1981
        %v1983 = vrot.slane %v1799, %v1982
        %v1986 = vmul.f32 %v1943, %v1979
        %v1987 = vmul.f32 %v1944, %v1983
        %v1988 = vmul.f32 %v1945, %v1979
        %v1989 = vmul.f32 %v1946, %v1983
        %v1990 = vmul.f32 %v1947, %v1979
        %v1991 = vmul.f32 %v1948, %v1983
        %v1992 = vmul.f32 %v1949, %v1979
        %v1993 = vmul.f32 %v1950, %v1983
        %v1994 = vmul.f32 %v1951, %v1979
        %v1995 = vmul.f32 %v1952, %v1983
        %v1996 = vmul.f32 %v1953, %v1979
        %v1997 = vmul.f32 %v1954, %v1983
        %v1998 = vmul.f32 %v1955, %v1979
        %v1999 = vmul.f32 %v1956, %v1983
        %v2000 = vmul.f32 %v1957, %v1979
        %v2001 = vmul.f32 %v1958, %v1983
        %v2002 = vmul.f32 %v1959, %v1979
        %v2003 = vmul.f32 %v1960, %v1983
        %v2004 = vmul.f32 %v1961, %v1979
        %v2005 = vmul.f32 %v1962, %v1983
        %v2006 = vmul.f32 %v1963, %v1979
        %v2007 = vmul.f32 %v1964, %v1983
        %v2008 = vmul.f32 %v1965, %v1979
        %v2009 = vmul.f32 %v1966, %v1983
        %v2010 = vmul.f32 %v1967, %v1979
        %v2011 = vmul.f32 %v1968, %v1983
        %v2012 = vmul.f32 %v1969, %v1979
        %v2013 = vmul.f32 %v1970, %v1983
        %v2014 = vmul.f32 %v1971, %v1979
        %v2015 = vmul.f32 %v1972, %v1983
        %v2016 = vmul.f32 %v1973, %v1979
        %v2017 = vmul.f32 %v1974, %v1983
        %v2018 = vmul.f32 %v1986, %v1748
        %v2019 = vmul.f32 %v1987, %v1749
        %v2020 = vmul.f32 %v1988, %v1751
        %v2021 = vmul.f32 %v1989, %v1752
        %v2022 = vmul.f32 %v1990, %v1754
        %v2023 = vmul.f32 %v1991, %v1755
        %v2024 = vmul.f32 %v1992, %v1757
        %v2025 = vmul.f32 %v1993, %v1758
        %v2026 = vmul.f32 %v1994, %v1760
        %v2027 = vmul.f32 %v1995, %v1761
        %v2028 = vmul.f32 %v1996, %v1763
        %v2029 = vmul.f32 %v1997, %v1764
        %v2030 = vmul.f32 %v1998, %v1766
        %v2031 = vmul.f32 %v1999, %v1767
        %v2032 = vmul.f32 %v2000, %v1769
        %v2033 = vmul.f32 %v2001, %v1770
        %v2034 = vmul.f32 %v2002, %v1772
        %v2035 = vmul.f32 %v2003, %v1773
        %v2036 = vmul.f32 %v2004, %v1775
        %v2037 = vmul.f32 %v2005, %v1776
        %v2038 = vmul.f32 %v2006, %v1778
        %v2039 = vmul.f32 %v2007, %v1779
        %v2040 = vmul.f32 %v2008, %v1781
        %v2041 = vmul.f32 %v2009, %v1782
        %v2042 = vmul.f32 %v2010, %v1784
        %v2043 = vmul.f32 %v2011, %v1785
        %v2044 = vmul.f32 %v2012, %v1787
        %v2045 = vmul.f32 %v2013, %v1788
        %v2046 = vmul.f32 %v2014, %v1790
        %v2047 = vmul.f32 %v2015, %v1791
        %v2048 = vmul.f32 %v2016, %v1793
        %v2049 = vmul.f32 %v2017, %v1794
        %v2051 = vlaneseq
        %v2052 = vshrl.u32 %v2051, 7
        %v2053 = vsub.s32 0, %v2052
        %v2054 = vrot.slane %v1801, %v2053
        %v2055 = vlaneseq
        %v2056 = vshrl.u32 %v2055, 7
        %v2057 = vsub.s32 1, %v2056
        %v2058 = vrot.slane %v1801, %v2057
        %v2061 = vsub.f32 %v2054, %v398
        %v2062 = vsub.f32 %v2058, %v398
        %v2063 = vsub.f32 %v2054, %v399
        %v2064 = vsub.f32 %v2058, %v399
        %v2065 = vsub.f32 %v2054, %v400
        %v2066 = vsub.f32 %v2058, %v400
        %v2067 = vsub.f32 %v2054, %v401
        %v2068 = vsub.f32 %v2058, %v401
        %v2069 = vsub.f32 %v2054, %v402
        %v2070 = vsub.f32 %v2058, %v402
        %v2071 = vsub.f32 %v2054, %v403
        %v2072 = vsub.f32 %v2058, %v403
        %v2073 = vsub.f32 %v2054, %v404
        %v2074 = vsub.f32 %v2058, %v404
        %v2075 = vsub.f32 %v2054, %v405
        %v2076 = vsub.f32 %v2058, %v405
        %v2077 = vsub.f32 %v2054, %v406
        %v2078 = vsub.f32 %v2058, %v406
        %v2079 = vsub.f32 %v2054, %v407
        %v2080 = vsub.f32 %v2058, %v407
        %v2081 = vsub.f32 %v2054, %v408
        %v2082 = vsub.f32 %v2058, %v408
        %v2083 = vsub.f32 %v2054, %v409
        %v2084 = vsub.f32 %v2058, %v409
        %v2085 = vsub.f32 %v2054, %v410
        %v2086 = vsub.f32 %v2058, %v410
        %v2087 = vsub.f32 %v2054, %v411
        %v2088 = vsub.f32 %v2058, %v411
        %v2089 = vsub.f32 %v2054, %v412
        %v2090 = vsub.f32 %v2058, %v412
        %v2091 = vsub.f32 %v2054, %v413
        %v2092 = vsub.f32 %v2058, %v413
        %v2094 = vlaneseq
        %v2095 = vshrl.u32 %v2094, 7
        %v2096 = vsub.s32 0, %v2095
        %v2097 = vrot.slane %v1803, %v2096
        %v2098 = vlaneseq
        %v2099 = vshrl.u32 %v2098, 7
        %v2100 = vsub.s32 1, %v2099
        %v2101 = vrot.slane %v1803, %v2100
        %v2104 = vmul.f32 %v2061, %v2097
        %v2105 = vmul.f32 %v2062, %v2101
        %v2106 = vmul.f32 %v2063, %v2097
        %v2107 = vmul.f32 %v2064, %v2101
        %v2108 = vmul.f32 %v2065, %v2097
        %v2109 = vmul.f32 %v2066, %v2101
        %v2110 = vmul.f32 %v2067, %v2097
        %v2111 = vmul.f32 %v2068, %v2101
        %v2112 = vmul.f32 %v2069, %v2097
        %v2113 = vmul.f32 %v2070, %v2101
        %v2114 = vmul.f32 %v2071, %v2097
        %v2115 = vmul.f32 %v2072, %v2101
        %v2116 = vmul.f32 %v2073, %v2097
        %v2117 = vmul.f32 %v2074, %v2101
        %v2118 = vmul.f32 %v2075, %v2097
        %v2119 = vmul.f32 %v2076, %v2101
        %v2120 = vmul.f32 %v2077, %v2097
        %v2121 = vmul.f32 %v2078, %v2101
        %v2122 = vmul.f32 %v2079, %v2097
        %v2123 = vmul.f32 %v2080, %v2101
        %v2124 = vmul.f32 %v2081, %v2097
        %v2125 = vmul.f32 %v2082, %v2101
        %v2126 = vmul.f32 %v2083, %v2097
        %v2127 = vmul.f32 %v2084, %v2101
        %v2128 = vmul.f32 %v2085, %v2097
        %v2129 = vmul.f32 %v2086, %v2101
        %v2130 = vmul.f32 %v2087, %v2097
        %v2131 = vmul.f32 %v2088, %v2101
        %v2132 = vmul.f32 %v2089, %v2097
        %v2133 = vmul.f32 %v2090, %v2101
        %v2134 = vmul.f32 %v2091, %v2097
        %v2135 = vmul.f32 %v2092, %v2101
        %v2136 = vmul.f32 %v2104, %v1916
        %v2137 = vmul.f32 %v2105, %v1900
        %v2138 = vmul.f32 %v2106, %v1917
        %v2139 = vmul.f32 %v2107, %v1901
        %v2140 = vmul.f32 %v2108, %v1918
        %v2141 = vmul.f32 %v2109, %v1902
        %v2142 = vmul.f32 %v2110, %v1919
        %v2143 = vmul.f32 %v2111, %v1903
        %v2144 = vmul.f32 %v2112, %v1920
        %v2145 = vmul.f32 %v2113, %v1904
        %v2146 = vmul.f32 %v2114, %v1921
        %v2147 = vmul.f32 %v2115, %v1905
        %v2148 = vmul.f32 %v2116, %v1922
        %v2149 = vmul.f32 %v2117, %v1906
        %v2150 = vmul.f32 %v2118, %v1923
        %v2151 = vmul.f32 %v2119, %v1907
        %v2152 = vmul.f32 %v2120, %v1924
        %v2153 = vmul.f32 %v2121, %v1908
        %v2154 = vmul.f32 %v2122, %v1925
        %v2155 = vmul.f32 %v2123, %v1909
        %v2156 = vmul.f32 %v2124, %v1926
        %v2157 = vmul.f32 %v2125, %v1910
        %v2158 = vmul.f32 %v2126, %v1927
        %v2159 = vmul.f32 %v2127, %v1911
        %v2160 = vmul.f32 %v2128, %v1928
        %v2161 = vmul.f32 %v2129, %v1912
        %v2162 = vmul.f32 %v2130, %v1929
        %v2163 = vmul.f32 %v2131, %v1913
        %v2164 = vmul.f32 %v2132, %v1930
        %v2165 = vmul.f32 %v2133, %v1914
        %v2166 = vmul.f32 %v2134, %v1931
        %v2167 = vmul.f32 %v2135, %v1915
        %v2168 = vadd.f32 %v2018, %v2136
        %v2169 = vadd.f32 %v2019, %v2137
        %v2170 = vadd.f32 %v2020, %v2138
        %v2171 = vadd.f32 %v2021, %v2139
        %v2172 = vadd.f32 %v2022, %v2140
        %v2173 = vadd.f32 %v2023, %v2141
        %v2174 = vadd.f32 %v2024, %v2142
        %v2175 = vadd.f32 %v2025, %v2143
        %v2176 = vadd.f32 %v2026, %v2144
        %v2177 = vadd.f32 %v2027, %v2145
        %v2178 = vadd.f32 %v2028, %v2146
        %v2179 = vadd.f32 %v2029, %v2147
        %v2180 = vadd.f32 %v2030, %v2148
        %v2181 = vadd.f32 %v2031, %v2149
        %v2182 = vadd.f32 %v2032, %v2150
        %v2183 = vadd.f32 %v2033, %v2151
        %v2184 = vadd.f32 %v2034, %v2152
        %v2185 = vadd.f32 %v2035, %v2153
        %v2186 = vadd.f32 %v2036, %v2154
        %v2187 = vadd.f32 %v2037, %v2155
        %v2188 = vadd.f32 %v2038, %v2156
        %v2189 = vadd.f32 %v2039, %v2157
        %v2190 = vadd.f32 %v2040, %v2158
        %v2191 = vadd.f32 %v2041, %v2159
        %v2192 = vadd.f32 %v2042, %v2160
        %v2193 = vadd.f32 %v2043, %v2161
        %v2194 = vadd.f32 %v2044, %v2162
        %v2195 = vadd.f32 %v2045, %v2163
        %v2196 = vadd.f32 %v2046, %v2164
        %v2197 = vadd.f32 %v2047, %v2165
        %v2198 = vadd.f32 %v2048, %v2166
        %v2199 = vadd.f32 %v2049, %v2167
        %v2200 = vsub.f32 0.0, %v187
        %v2201 = vsub.f32 0.0, %v188
        %v2202 = vsub.f32 0.0, %v189
        %v2203 = vsub.f32 0.0, %v190
        %v2204 = vsub.f32 0.0, %v191
        %v2205 = vsub.f32 0.0, %v192
        %v2206 = vsub.f32 0.0, %v193
        %v2207 = vsub.f32 0.0, %v194
        %v2208 = vsub.f32 0.0, %v195
        %v2209 = vsub.f32 0.0, %v196
        %v2210 = vsub.f32 0.0, %v197
        %v2211 = vsub.f32 0.0, %v198
        %v2212 = vsub.f32 0.0, %v199
        %v2213 = vsub.f32 0.0, %v200
        %v2214 = vsub.f32 0.0, %v201
        %v2215 = vsub.f32 0.0, %v202
        %v2216 = vmul.f32 %v2200, 1.442695
        %v2217 = vpow.pop %v2216
        %v2218 = vmul.f32 %v2201, 1.442695
        %v2219 = vpow.pop %v2218
        %v2220 = vmul.f32 %v2202, 1.442695
        %v2221 = vpow.pop %v2220
        %v2222 = vmul.f32 %v2203, 1.442695
        %v2223 = vpow.pop %v2222
        %v2224 = vmul.f32 %v2204, 1.442695
        %v2225 = vpow.pop %v2224
        %v2226 = vmul.f32 %v2205, 1.442695
        %v2227 = vpow.pop %v2226
        %v2228 = vmul.f32 %v2206, 1.442695
        %v2229 = vpow.pop %v2228
        %v2230 = vmul.f32 %v2207, 1.442695
        %v2231 = vpow.pop %v2230
        %v2232 = vmul.f32 %v2208, 1.442695
        %v2233 = vpow.pop %v2232
        %v2234 = vmul.f32 %v2209, 1.442695
        %v2235 = vpow.pop %v2234
        %v2236 = vmul.f32 %v2210, 1.442695
        %v2237 = vpow.pop %v2236
        %v2238 = vmul.f32 %v2211, 1.442695
        %v2239 = vpow.pop %v2238
        %v2240 = vmul.f32 %v2212, 1.442695
        %v2241 = vpow.pop %v2240
        %v2242 = vmul.f32 %v2213, 1.442695
        %v2243 = vpow.pop %v2242
        %v2244 = vmul.f32 %v2214, 1.442695
        %v2245 = vpow.pop %v2244
        %v2246 = vmul.f32 %v2215, 1.442695
        %v2247 = vpow.pop %v2246
        %v2248 = vadd.f32 %v2217, 1.0
        %v2249 = vadd.f32 %v2219, 1.0
        %v2250 = vadd.f32 %v2221, 1.0
        %v2251 = vadd.f32 %v2223, 1.0
        %v2252 = vadd.f32 %v2225, 1.0
        %v2253 = vadd.f32 %v2227, 1.0
        %v2254 = vadd.f32 %v2229, 1.0
        %v2255 = vadd.f32 %v2231, 1.0
        %v2256 = vadd.f32 %v2233, 1.0
        %v2257 = vadd.f32 %v2235, 1.0
        %v2258 = vadd.f32 %v2237, 1.0
        %v2259 = vadd.f32 %v2239, 1.0
        %v2260 = vadd.f32 %v2241, 1.0
        %v2261 = vadd.f32 %v2243, 1.0
        %v2262 = vadd.f32 %v2245, 1.0
        %v2263 = vadd.f32 %v2247, 1.0
        %v2264 = vrcp.pop %v2248
        %v2265 = vmul.f32 1.0, %v2264
        %v2266 = vrcp.pop %v2249
        %v2267 = vmul.f32 1.0, %v2266
        %v2268 = vrcp.pop %v2250
        %v2269 = vmul.f32 1.0, %v2268
        %v2270 = vrcp.pop %v2251
        %v2271 = vmul.f32 1.0, %v2270
        %v2272 = vrcp.pop %v2252
        %v2273 = vmul.f32 1.0, %v2272
        %v2274 = vrcp.pop %v2253
        %v2275 = vmul.f32 1.0, %v2274
        %v2276 = vrcp.pop %v2254
        %v2277 = vmul.f32 1.0, %v2276
        %v2278 = vrcp.pop %v2255
        %v2279 = vmul.f32 1.0, %v2278
        %v2280 = vrcp.pop %v2256
        %v2281 = vmul.f32 1.0, %v2280
        %v2282 = vrcp.pop %v2257
        %v2283 = vmul.f32 1.0, %v2282
        %v2284 = vrcp.pop %v2258
        %v2285 = vmul.f32 1.0, %v2284
        %v2286 = vrcp.pop %v2259
        %v2287 = vmul.f32 1.0, %v2286
        %v2288 = vrcp.pop %v2260
        %v2289 = vmul.f32 1.0, %v2288
        %v2290 = vrcp.pop %v2261
        %v2291 = vmul.f32 1.0, %v2290
        %v2292 = vrcp.pop %v2262
        %v2293 = vmul.f32 1.0, %v2292
        %v2294 = vrcp.pop %v2263
        %v2295 = vmul.f32 1.0, %v2294
        %v2296 = vmul.f32 %v187, %v2265
        %v2297 = vmul.f32 %v188, %v2267
        %v2298 = vmul.f32 %v189, %v2269
        %v2299 = vmul.f32 %v190, %v2271
        %v2300 = vmul.f32 %v191, %v2273
        %v2301 = vmul.f32 %v192, %v2275
        %v2302 = vmul.f32 %v193, %v2277
        %v2303 = vmul.f32 %v194, %v2279
        %v2304 = vmul.f32 %v195, %v2281
        %v2305 = vmul.f32 %v196, %v2283
        %v2306 = vmul.f32 %v197, %v2285
        %v2307 = vmul.f32 %v198, %v2287
        %v2308 = vmul.f32 %v199, %v2289
        %v2309 = vmul.f32 %v200, %v2291
        %v2310 = vmul.f32 %v201, %v2293
        %v2311 = vmul.f32 %v202, %v2295
        %v2312 = vld [vmem:[%s2] sm:$0xff]
        %v2313 = vld [vmem:[%s2 + $0x8] sm:$0xff]
        %v2314 = vld [vmem:[%s2 + $0x10] sm:$0xff]
        %v2315 = vld [vmem:[%s2 + $0x18] sm:$0xff]
        %v2316 = vld [vmem:[%s2 + $0x20] sm:$0xff]
        %v2317 = vld [vmem:[%s2 + $0x28] sm:$0xff]
        %v2318 = vld [vmem:[%s2 + $0x30] sm:$0xff]
        %v2319 = vld [vmem:[%s2 + $0x38] sm:$0xff]
        %v2320 = vld [vmem:[%s2 + $0x40] sm:$0xff]
        %v2321 = vld [vmem:[%s2 + $0x48] sm:$0xff]
        %v2322 = vld [vmem:[%s2 + $0x50] sm:$0xff]
        %v2323 = vld [vmem:[%s2 + $0x58] sm:$0xff]
        %v2324 = vld [vmem:[%s2 + $0x60] sm:$0xff]
        %v2325 = vld [vmem:[%s2 + $0x68] sm:$0xff]
        %v2326 = vld [vmem:[%s2 + $0x70] sm:$0xff]
        %v2327 = vld [vmem:[%s2 + $0x78] sm:$0xff]
        %v2328 = vld [vmem:[%s2 + $0x80] sm:$0xff]
        %v2329 = vld [vmem:[%s2 + $0x88] sm:$0xff]
        %v2330 = vld [vmem:[%s2 + $0x90] sm:$0xff]
        %v2331 = vld [vmem:[%s2 + $0x98] sm:$0xff]
        %v2332 = vld [vmem:[%s2 + $0xa0] sm:$0xff]
        %v2333 = vld [vmem:[%s2 + $0xa8] sm:$0xff]
        %v2334 = vld [vmem:[%s2 + $0xb0] sm:$0xff]
        %v2335 = vld [vmem:[%s2 + $0xb8] sm:$0xff]
        %v2336 = vld [vmem:[%s2 + $0xc0] sm:$0xff]
        %v2337 = vld [vmem:[%s2 + $0xc8] sm:$0xff]
        %v2338 = vld [vmem:[%s2 + $0xd0] sm:$0xff]
        %v2339 = vld [vmem:[%s2 + $0xd8] sm:$0xff]
        %v2340 = vld [vmem:[%s2 + $0xe0] sm:$0xff]
        %v2341 = vld [vmem:[%s2 + $0xe8] sm:$0xff]
        %v2342 = vld [vmem:[%s2 + $0xf0] sm:$0xff]
        %v2343 = vld [vmem:[%s2 + $0xf8] sm:$0xff]
        %v2344 = vld [vmem:[%s2 + $0x100] sm:$0xff]
        %v2345 = vld [vmem:[%s2 + $0x108] sm:$0xff]
        %v2346 = vld [vmem:[%s2 + $0x110] sm:$0xff]
        %v2347 = vld [vmem:[%s2 + $0x118] sm:$0xff]
        %v2349 = vsel %vm363, %v2296, 0
        %v2352 = vsel %vm363, %v2297, 0
        %v2355 = vsel %vm363, %v2298, 0
        %v2358 = vsel %vm363, %v2299, 0
        %v2361 = vsel %vm363, %v2300, 0
        %v2364 = vsel %vm363, %v2301, 0
        %v2367 = vsel %vm363, %v2302, 0
        %v2370 = vsel %vm363, %v2303, 0
        %v2373 = vsel %vm363, %v2304, 0
        %v2376 = vsel %vm363, %v2305, 0
        %v2379 = vsel %vm363, %v2306, 0
        %v2382 = vsel %vm363, %v2307, 0
        %v2385 = vsel %vm363, %v2308, 0
        %v2388 = vsel %vm363, %v2309, 0
        %v2391 = vsel %vm363, %v2310, 0
        %v2394 = vsel %vm363, %v2311, 0
        %2396 = vmatprep.subr.mxu0 0.0
        %2397 = vmatpush1.msra.mxu0 %v2312
        %2398 = vmatprep.subr.mxu0 0.0
        %2399 = vmatpush1.msra.mxu0 %v2313
        %2400 = vmatprep.subr.mxu0 0.0
        %2401 = vmatpush1.msra.mxu0 %v2314
        %2402 = vmatprep.subr.mxu0 0.0
        %2403 = vmatpush1.msra.mxu0 %v2315
        %2404 = vmatprep.subr.mxu0 0.0
        %2405 = vmatpush1.msra.mxu0 %v2316
        %2406 = vmatprep.subr.mxu0 0.0
        %2407 = vmatpush1.msra.mxu0 %v2317
        %2408 = vmatprep.subr.mxu0 0.0
        %2409 = vmatpush1.msra.mxu0 %v2318
        %2410 = vmatprep.subr.mxu0 0.0
        %2411 = vmatpush1.msra.mxu0 %v2319
        %2412 = vmatprep.subr.mxu0 0.0
        %2413 = vmatpush1.msra.mxu0 %v2320
        %2414 = vmatprep.subr.mxu0 0.0
        %2415 = vmatpush1.msra.mxu0 %v2321
        %2416 = vmatprep.subr.mxu0 0.0
        %2417 = vmatpush1.msra.mxu0 %v2322
        %2418 = vmatprep.subr.mxu0 0.0
        %2419 = vmatpush1.msra.mxu0 %v2323
        %2420 = vmatprep.subr.mxu0 0.0
        %2421 = vmatpush1.msra.mxu0 %v2324
        %2422 = vmatprep.subr.mxu0 0.0
        %2423 = vmatpush1.msra.mxu0 %v2325
        %2424 = vmatprep.subr.mxu0 0.0
        %2425 = vmatpush1.msra.mxu0 %v2326
        %2426 = vmatprep.subr.mxu0 0.0
        %2427 = vmatpush1.msra.mxu0 %v2327
        %2428 = vmatprep.subr.mxu0 0.0
        %2429 = vmatpush1.msra.mxu0 %v2328
        %2430 = vmatprep.subr.mxu0 0.0
        %2431 = vmatpush1.msra.mxu0 %v2329
        %2432 = vmatprep.subr.mxu0 0.0
        %2433 = vmatpush1.msra.mxu0 %v2330
        %2434 = vmatprep.subr.mxu0 0.0
        %2435 = vmatpush1.msra.mxu0 %v2331
        %2436 = vmatprep.subr.mxu0 0.0
        %2437 = vmatpush1.msra.mxu0 %v2332
        %2438 = vmatprep.subr.mxu0 0.0
        %2439 = vmatpush1.msra.mxu0 %v2333
        %2440 = vmatprep.subr.mxu0 0.0
        %2441 = vmatpush1.msra.mxu0 %v2334
        %2442 = vmatprep.subr.mxu0 0.0
        %2443 = vmatpush1.msra.mxu0 %v2335
        %2444 = vmatprep.subr.mxu0 0.0
        %2445 = vmatpush1.msra.mxu0 %v2336
        %2446 = vmatprep.subr.mxu0 0.0
        %2447 = vmatpush1.msra.mxu0 %v2337
        %2448 = vmatprep.subr.mxu0 0.0
        %2449 = vmatpush1.msra.mxu0 %v2338
        %2450 = vmatprep.subr.mxu0 0.0
        %2451 = vmatpush1.msra.mxu0 %v2339
        %2452 = vmatprep.subr.mxu0 0.0
        %2453 = vmatpush1.msra.mxu0 %v2340
        %2454 = vmatprep.subr.mxu0 0.0
        %2455 = vmatpush1.msra.mxu0 %v2341
        %2456 = vmatprep.subr.mxu0 0.0
        %2457 = vmatpush1.msra.mxu0 %v2342
        %2458 = vmatprep.subr.mxu0 0.0
        %2459 = vmatpush1.msra.mxu0 %v2343
        %2460 = vmatprep.mubr.f32.mxu0 %v2169
        %2461 = vmatmul.mubr.f32.gmra.mrb[0].mxu0 %v2168
        %v2462 = vpop.f32.mrb[0].mxu0
        %v2463 = vadd.f32 0.0, %v2462
        %v2464 = vpop.f32.mrb[0].mxu0
        %2465 = vmatprep.mubr.f32.mxu0 %v2171
        %2466 = vmatmul.mubr.f32.gmra.mrb[0].mxu0 %v2170
        %v2467 = vpop.f32.mrb[0].mxu0
        %v2468 = vadd.f32 0.0, %v2467
        %v2469 = vpop.f32.mrb[0].mxu0
        %2470 = vmatprep.mubr.f32.mxu0 %v2173
        %2471 = vmatmul.mubr.f32.gmra.mrb[0].mxu0 %v2172
        %v2472 = vpop.f32.mrb[0].mxu0
        %v2473 = vadd.f32 0.0, %v2472
        %v2474 = vpop.f32.mrb[0].mxu0
        %2475 = vmatprep.mubr.f32.mxu0 %v2175
        %2476 = vmatmul.mubr.f32.gmra.mrb[0].mxu0 %v2174
        %v2477 = vpop.f32.mrb[0].mxu0
        %v2478 = vadd.f32 0.0, %v2477
        %v2479 = vpop.f32.mrb[0].mxu0
        %2480 = vmatprep.mubr.f32.mxu0 %v2177
        %2481 = vmatmul.mubr.f32.gmra.mrb[0].mxu0 %v2176
        %v2482 = vpop.f32.mrb[0].mxu0
        %v2483 = vadd.f32 0.0, %v2482
        %v2484 = vpop.f32.mrb[0].mxu0
        %2485 = vmatprep.mubr.f32.mxu0 %v2179
        %2486 = vmatmul.mubr.f32.gmra.mrb[0].mxu0 %v2178
        %v2487 = vpop.f32.mrb[0].mxu0
        %v2488 = vadd.f32 0.0, %v2487
        %v2489 = vpop.f32.mrb[0].mxu0
        %2490 = vmatprep.mubr.f32.mxu0 %v2181
        %2491 = vmatmul.mubr.f32.gmra.mrb[0].mxu0 %v2180
        %v2492 = vpop.f32.mrb[0].mxu0
        %v2493 = vadd.f32 0.0, %v2492
        %v2494 = vpop.f32.mrb[0].mxu0
        %2495 = vmatprep.mubr.f32.mxu0 %v2183
        %2496 = vmatmul.mubr.f32.gmra.mrb[0].mxu0 %v2182
        %v2497 = vpop.f32.mrb[0].mxu0
        %v2498 = vadd.f32 0.0, %v2497
        %v2499 = vpop.f32.mrb[0].mxu0
        %2500 = vmatprep.mubr.f32.mxu0 %v2185
        %2501 = vmatmul.mubr.f32.gmra.mrb[0].mxu0 %v2184
        %v2502 = vpop.f32.mrb[0].mxu0
        %v2503 = vadd.f32 0.0, %v2502
        %v2504 = vpop.f32.mrb[0].mxu0
        %2505 = vmatprep.mubr.f32.mxu0 %v2187
        %2506 = vmatmul.mubr.f32.gmra.mrb[0].mxu0 %v2186
        %v2507 = vpop.f32.mrb[0].mxu0
        %v2508 = vadd.f32 0.0, %v2507
        %v2509 = vpop.f32.mrb[0].mxu0
        %2510 = vmatprep.mubr.f32.mxu0 %v2189
        %2511 = vmatmul.mubr.f32.gmra.mrb[0].mxu0 %v2188
        %v2512 = vpop.f32.mrb[0].mxu0
        %v2513 = vadd.f32 0.0, %v2512
        %v2514 = vpop.f32.mrb[0].mxu0
        %2515 = vmatprep.mubr.f32.mxu0 %v2191
        %2516 = vmatmul.mubr.f32.gmra.mrb[0].mxu0 %v2190
        %v2517 = vpop.f32.mrb[0].mxu0
        %v2518 = vadd.f32 0.0, %v2517
        %v2519 = vpop.f32.mrb[0].mxu0
        %2520 = vmatprep.mubr.f32.mxu0 %v2193
        %2521 = vmatmul.mubr.f32.gmra.mrb[0].mxu0 %v2192
        %v2522 = vpop.f32.mrb[0].mxu0
        %v2523 = vadd.f32 0.0, %v2522
        %v2524 = vpop.f32.mrb[0].mxu0
        %2525 = vmatprep.mubr.f32.mxu0 %v2195
        %2526 = vmatmul.mubr.f32.gmra.mrb[0].mxu0 %v2194
        %v2527 = vpop.f32.mrb[0].mxu0
        %v2528 = vadd.f32 0.0, %v2527
        %v2529 = vpop.f32.mrb[0].mxu0
        %2530 = vmatprep.mubr.f32.mxu0 %v2197
        %2531 = vmatmul.mubr.f32.gmra.mrb[0].mxu0 %v2196
        %v2532 = vpop.f32.mrb[0].mxu0
        %v2533 = vadd.f32 0.0, %v2532
        %v2534 = vpop.f32.mrb[0].mxu0
        %2535 = vmatprep.mubr.f32.mxu0 %v2199
        %2536 = vmatmul.mubr.f32.gmra.mrb[0].mxu0 %v2198
        %v2537 = vpop.f32.mrb[0].mxu0
        %v2538 = vadd.f32 0.0, %v2537
        %v2539 = vpop.f32.mrb[0].mxu0
        %2540 = vdwg.mxu0
        %2541 = vmatprep.subr.mxu0 0.0
        %2542 = vmatpush1.msra.mxu0 %v2344
        %2543 = vmatprep.subr.mxu0 0.0
        %2544 = vmatpush1.msra.mxu0 %v2345
        %2545 = vmatprep.subr.mxu0 0.0
        %2546 = vmatpush1.msra.mxu0 %v2346
        %2547 = vmatprep.subr.mxu0 0.0
        %2548 = vmatpush1.msra.mxu0 %v2347
        %2549 = vmatprep.subr.mxu0 0.0
        %2550 = vmatpush1.msra.mxu0 0.0
        %2551 = vmatprep.subr.mxu0 0.0
        %2552 = vmatpush1.msra.mxu0 0.0
        %2553 = vmatprep.subr.mxu0 0.0
        %2554 = vmatpush1.msra.mxu0 0.0
        %2555 = vmatprep.subr.mxu0 0.0
        %2556 = vmatpush1.msra.mxu0 0.0
        %2557 = vmatprep.subr.mxu0 0.0
        %2558 = vmatpush1.msra.mxu0 0.0
        %2559 = vmatprep.subr.mxu0 0.0
        %2560 = vmatpush1.msra.mxu0 0.0
        %2561 = vmatprep.subr.mxu0 0.0
        %2562 = vmatpush1.msra.mxu0 0.0
        %2563 = vmatprep.subr.mxu0 0.0
        %2564 = vmatpush1.msra.mxu0 0.0
        %2565 = vmatprep.subr.mxu0 0.0
        %2566 = vmatpush1.msra.mxu0 0.0
        %2567 = vmatprep.subr.mxu0 0.0
        %2568 = vmatpush1.msra.mxu0 0.0
        %2569 = vmatprep.subr.mxu0 0.0
        %2570 = vmatpush1.msra.mxu0 0.0
        %2571 = vmatprep.subr.mxu0 0.0
        %2572 = vmatpush1.msra.mxu0 0.0
        %2573 = vmatprep.subr.mxu0 0.0
        %2574 = vmatpush1.msra.mxu0 0.0
        %2575 = vmatprep.subr.mxu0 0.0
        %2576 = vmatpush1.msra.mxu0 0.0
        %2577 = vmatprep.subr.mxu0 0.0
        %2578 = vmatpush1.msra.mxu0 0.0
        %2579 = vmatprep.subr.mxu0 0.0
        %2580 = vmatpush1.msra.mxu0 0.0
        %2581 = vmatprep.subr.mxu0 0.0
        %2582 = vmatpush1.msra.mxu0 0.0
        %2583 = vmatprep.subr.mxu0 0.0
        %2584 = vmatpush1.msra.mxu0 0.0
        %2585 = vmatprep.subr.mxu0 0.0
        %2586 = vmatpush1.msra.mxu0 0.0
        %2587 = vmatprep.subr.mxu0 0.0
        %2588 = vmatpush1.msra.mxu0 0.0
        %2589 = vmatprep.subr.mxu0 0.0
        %2590 = vmatpush1.msra.mxu0 0.0
        %2591 = vmatprep.subr.mxu0 0.0
        %2592 = vmatpush1.msra.mxu0 0.0
        %2593 = vmatprep.subr.mxu0 0.0
        %2594 = vmatpush1.msra.mxu0 0.0
        %2595 = vmatprep.subr.mxu0 0.0
        %2596 = vmatpush1.msra.mxu0 0.0
        %2597 = vmatprep.subr.mxu0 0.0
        %2598 = vmatpush1.msra.mxu0 0.0
        %2599 = vmatprep.subr.mxu0 0.0
        %2600 = vmatpush1.msra.mxu0 0.0
        %2601 = vmatprep.subr.mxu0 0.0
        %2602 = vmatpush1.msra.mxu0 0.0
        %2603 = vmatprep.subr.mxu0 0.0
        %2604 = vmatpush1.msra.mxu0 0.0
        %2605 = vmatprep.mubr.f32.mxu0 0.0
        %2606 = vmatmul.mubr.f32.gmra.mrb[0].mxu0 %v2349
        %v2607 = vpop.f32.mrb[0].mxu0
        %v2608 = vadd.f32 %v2463, %v2607
        %v2609 = vpop.f32.mrb[0].mxu0
        %2610 = vmatprep.mubr.f32.mxu0 0.0
        %2611 = vmatmul.mubr.f32.gmra.mrb[0].mxu0 %v2352
        %v2612 = vpop.f32.mrb[0].mxu0
        %v2613 = vadd.f32 %v2468, %v2612
        %v2614 = vpop.f32.mrb[0].mxu0
        %2615 = vmatprep.mubr.f32.mxu0 0.0
        %2616 = vmatmul.mubr.f32.gmra.mrb[0].mxu0 %v2355
        %v2617 = vpop.f32.mrb[0].mxu0
        %v2618 = vadd.f32 %v2473, %v2617
        %v2619 = vpop.f32.mrb[0].mxu0
        %2620 = vmatprep.mubr.f32.mxu0 0.0
        %2621 = vmatmul.mubr.f32.gmra.mrb[0].mxu0 %v2358
        %v2622 = vpop.f32.mrb[0].mxu0
        %v2623 = vadd.f32 %v2478, %v2622
        %v2624 = vpop.f32.mrb[0].mxu0
        %2625 = vmatprep.mubr.f32.mxu0 0.0
        %2626 = vmatmul.mubr.f32.gmra.mrb[0].mxu0 %v2361
        %v2627 = vpop.f32.mrb[0].mxu0
        %v2628 = vadd.f32 %v2483, %v2627
        %v2629 = vpop.f32.mrb[0].mxu0
        %2630 = vmatprep.mubr.f32.mxu0 0.0
        %2631 = vmatmul.mubr.f32.gmra.mrb[0].mxu0 %v2364
        %v2632 = vpop.f32.mrb[0].mxu0
        %v2633 = vadd.f32 %v2488, %v2632
        %v2634 = vpop.f32.mrb[0].mxu0
        %2635 = vmatprep.mubr.f32.mxu0 0.0
        %2636 = vmatmul.mubr.f32.gmra.mrb[0].mxu0 %v2367
        %v2637 = vpop.f32.mrb[0].mxu0
        %v2638 = vadd.f32 %v2493, %v2637
        %v2639 = vpop.f32.mrb[0].mxu0
        %2640 = vmatprep.mubr.f32.mxu0 0.0
        %2641 = vmatmul.mubr.f32.gmra.mrb[0].mxu0 %v2370
        %v2642 = vpop.f32.mrb[0].mxu0
        %v2643 = vadd.f32 %v2498, %v2642
        %v2644 = vpop.f32.mrb[0].mxu0
        %2645 = vmatprep.mubr.f32.mxu0 0.0
        %2646 = vmatmul.mubr.f32.gmra.mrb[0].mxu0 %v2373
        %v2647 = vpop.f32.mrb[0].mxu0
        %v2648 = vadd.f32 %v2503, %v2647
        %v2649 = vpop.f32.mrb[0].mxu0
        %2650 = vmatprep.mubr.f32.mxu0 0.0
        %2651 = vmatmul.mubr.f32.gmra.mrb[0].mxu0 %v2376
        %v2652 = vpop.f32.mrb[0].mxu0
        %v2653 = vadd.f32 %v2508, %v2652
        %v2654 = vpop.f32.mrb[0].mxu0
        %2655 = vmatprep.mubr.f32.mxu0 0.0
        %2656 = vmatmul.mubr.f32.gmra.mrb[0].mxu0 %v2379
        %v2657 = vpop.f32.mrb[0].mxu0
        %v2658 = vadd.f32 %v2513, %v2657
        %v2659 = vpop.f32.mrb[0].mxu0
        %2660 = vmatprep.mubr.f32.mxu0 0.0
        %2661 = vmatmul.mubr.f32.gmra.mrb[0].mxu0 %v2382
        %v2662 = vpop.f32.mrb[0].mxu0
        %v2663 = vadd.f32 %v2518, %v2662
        %v2664 = vpop.f32.mrb[0].mxu0
        %2665 = vmatprep.mubr.f32.mxu0 0.0
        %2666 = vmatmul.mubr.f32.gmra.mrb[0].mxu0 %v2385
        %v2667 = vpop.f32.mrb[0].mxu0
        %v2668 = vadd.f32 %v2523, %v2667
        %v2669 = vpop.f32.mrb[0].mxu0
        %2670 = vmatprep.mubr.f32.mxu0 0.0
        %2671 = vmatmul.mubr.f32.gmra.mrb[0].mxu0 %v2388
        %v2672 = vpop.f32.mrb[0].mxu0
        %v2673 = vadd.f32 %v2528, %v2672
        %v2674 = vpop.f32.mrb[0].mxu0
        %2675 = vmatprep.mubr.f32.mxu0 0.0
        %2676 = vmatmul.mubr.f32.gmra.mrb[0].mxu0 %v2391
        %v2677 = vpop.f32.mrb[0].mxu0
        %v2678 = vadd.f32 %v2533, %v2677
        %v2679 = vpop.f32.mrb[0].mxu0
        %2680 = vmatprep.mubr.f32.mxu0 0.0
        %2681 = vmatmul.mubr.f32.gmra.mrb[0].mxu0 %v2394
        %v2682 = vpop.f32.mrb[0].mxu0
        %v2683 = vadd.f32 %v2538, %v2682
        %v2684 = vpop.f32.mrb[0].mxu0
        %2685 = vdwg.mxu0
        %2686 = vst [vmem:[%s179] sm:$0xff] %v2608
        %2687 = vst [vmem:[%s179 + $0x8] sm:$0xff] %v2613
        %2688 = vst [vmem:[%s179 + $0x10] sm:$0xff] %v2618
        %2689 = vst [vmem:[%s179 + $0x18] sm:$0xff] %v2623
        %2690 = vst [vmem:[%s179 + $0x20] sm:$0xff] %v2628
        %2691 = vst [vmem:[%s179 + $0x28] sm:$0xff] %v2633
        %2692 = vst [vmem:[%s179 + $0x30] sm:$0xff] %v2638
        %2693 = vst [vmem:[%s179 + $0x38] sm:$0xff] %v2643
        %2694 = vst [vmem:[%s179 + $0x40] sm:$0xff] %v2648
        %2695 = vst [vmem:[%s179 + $0x48] sm:$0xff] %v2653
        %2696 = vst [vmem:[%s179 + $0x50] sm:$0xff] %v2658
        %2697 = vst [vmem:[%s179 + $0x58] sm:$0xff] %v2663
        %2698 = vst [vmem:[%s179 + $0x60] sm:$0xff] %v2668
        %2699 = vst [vmem:[%s179 + $0x68] sm:$0xff] %v2673
        %2700 = vst [vmem:[%s179 + $0x70] sm:$0xff] %v2678
        %2701 = vst [vmem:[%s179 + $0x78] sm:$0xff] %v2683
        %s2702 = sand.u32 %s94, 1
        %s2703 = scalar_lea.sflag [#allocation4], %s2702
        %s2704 = sand.u32 %s94, 1
        %s2705 = smul.addr %s2704, 128
        %s2706 = scalar_lea.vmem [#allocation5], %s2705
        // Predicated region
        $region37: #{tpu_custom_call.1} parent=31 // pred_check
          %p2707 = pneg %p104
        $region38: #{tpu_custom_call.1} parent=31 // pred_check_branch
          %2709 = sbr.rel (%p2707) target = $region40
        $region39: #{tpu_custom_call.1} parent=31 // pred_region
          %s2710 = smul.u32 16, %s18
          %s2712 = ssub.s32 2048, 2048
          %2713 = vsyncadd %s2703, %s2712
          %s2714 = smul.addr %s2710, 128
          %s2715 = scalar_lea.hbm %s3, %s2714
          %s2716 = sshll.u32 %s2706, 4
          %s2717 = int_to_ptr.vmem [resolvable:$true] %s2716
          %2722 = dma.vmem_to_hbm [thread:$0]  %s2717, 2048, %s2715, %s2703, 128, 128, 8
        $region40: #{tpu_custom_call.1} parent=31 // pred_fallthru
          _
      $region32: #{tpu_custom_call.1} parent=5 // pred_fallthru
        _
      %p2723 = scmp.le.s32.totalorder 2, %s13
      // Predicated region
      $region41: #{tpu_custom_call.1} parent=5 // pred_check
        %p2724 = pneg %p2723
      $region42: #{tpu_custom_call.1} parent=5 // pred_check_branch
        %2726 = sbr.rel (%p2724) target = $region44
      $region43: #{tpu_custom_call.1} parent=5 // pred_region
        %s2727 = ssub.s32 %s13, 2
        // Predicated region
        $region45: #{tpu_custom_call.1} parent=43 // pred_check
          %p2728 = pneg %p110
        $region46: #{tpu_custom_call.1} parent=43 // pred_check_branch
          %2730 = sbr.rel (%p2728) target = $region48
        $region47: #{tpu_custom_call.1} parent=43 // pred_region
          %s2731 = sand.u32 %s95, 1
          %s2732 = scalar_lea.sflag [#allocation4], %s2731
          %s2733 = sand.u32 %s95, 1
          %s2734 = smul.addr %s2733, 128
          %s2735 = scalar_lea.vmem [#allocation5], %s2734
          %2736 = dma.done %s2732, 2048
        $region48: #{tpu_custom_call.1} parent=43 // pred_fallthru
          _
      $region44: #{tpu_custom_call.1} parent=5 // pred_fallthru
        _
    $region6: #{tpu_custom_call.1} parent=1 // loop_footer
      %s17 = sadd.s32 1, %s13
    $region7: #{tpu_custom_call.1} parent=1 // loop_footer_branch
      %12 = sbr.rel target = $region3
    $region8: #{tpu_custom_call.1} parent=1 // loop_exit
      _
    %2737 = vsyncpa [#allocation3], 1
    %s2738 = scalar_lea.sflag [#allocation3], 1
    %2739 = vsyncpa %s2738, 1
    %2740 = vsyncpa [#allocation4], 1
    %s2741 = scalar_lea.sflag [#allocation4], 1
    %2742 = vsyncpa %s2741, 1

</llo_original>
